<compile_context>
chip_gen: v6e
topology: v6e:2x2x1
jax: 0.10.0
libtpu: 0.0.40
codegen_flags: <defaults>
</compile_context>

<pallas_src>
import functools

import jax
import jax.numpy as jnp
from jax.experimental import pallas as pl
from jax.experimental.pallas import tpu as pltpu


def _round_up(x, m):
    return ((x + m - 1) // m) * m


# ----------------------------------------------------------------------------
# Fused kernel: per-image conv (shift-trick im2col, MXU dots, f32 accumulate)
# + at the last image: BatchNorm batch stats (masked, centered) + affine +
# LeakyReLU(0.1), all on the VMEM-resident result slab.
# ----------------------------------------------------------------------------
def _fused_conv_bn_lrelu_kernel(w_ref, x_ref, mask_ref, gamma_ref, beta_ref,
                                o_ref, *, taps, wp, tj, n_inner, oc_out,
                                m_count, eps, relu):
    """One grid step = one image.

    w_ref    : (KH*KW, OCp_w, Cp) bf16  per-tap weight matrices (resident)
    x_ref    : (1, Cp, LIN)       bf16  flattened, spatially padded image n
    mask_ref : (1, 1, Jp)         f32   1.0 at valid (strided) output positions
    gamma/beta : (1, OCp, 1)      f32
    o_ref    : (N, OCp, Jp)       f32   resident across the grid; raw conv result
                                        until the last step, then rewritten with
                                        BN + LeakyReLU applied.
    """
    n = pl.program_id(0)

    # ---- conv for image n: static shifted slices -> accumulated MXU dots ----
    for ti in range(n_inner):
        j0 = ti * tj                                        # static
        acc = jnp.zeros((w_ref.shape[1], tj), jnp.float32)  # (OCp_w, tj)
        for t, (kh, kw) in enumerate(taps):
            d = kh * wp + kw                                # static tap shift
            xw = x_ref[0, :, j0 + d:j0 + d + tj]            # (Cp, tj) bf16
            acc = acc + jnp.dot(w_ref[t], xw,
                                preferred_element_type=jnp.float32)
        o_ref[n, :, j0:j0 + tj] = acc[:oc_out, :]

    # ---- finalize at the last image: batch stats + affine + LeakyReLU ----
    @pl.when(n == pl.num_programs(0) - 1)
    def _():
        y = o_ref[...]                                      # (N, OCp, Jp) f32
        msk = mask_ref[...]                                 # (1, 1, Jp)
        inv_m = 1.0 / m_count
        s = jnp.sum(jnp.sum(y * msk, axis=2, keepdims=True),
                    axis=0, keepdims=True)
        mean = s * inv_m                                    # (1, OCp, 1)
        cen = (y - mean) * msk                              # centered, masked
        var = jnp.sum(jnp.sum(cen * cen, axis=2, keepdims=True),
                      axis=0, keepdims=True) * inv_m        # biased batch var
        scale = gamma_ref[...] * jax.lax.rsqrt(var + eps)
        shift = beta_ref[...] - mean * scale
        z = y * scale + shift
        o_ref[...] = jnp.maximum(z, 0.1 * z) if relu else z


@functools.partial(jax.jit,
                   static_argnames=("stride", "padding", "relu", "eps", "tj"))
def conv2d_batchnorm(x, conv_w, gamma, beta, *, stride=1, padding=1, relu=True,
                     eps=1e-5, tj=1024):
    """x: [N, C, H, W] f32.  conv_w: [OC, C, KH, KW].  gamma/beta: [OC]."""
    N, C, H, W = x.shape
    OC, _, KH, KW = conv_w.shape
    Hp, Wp = H + 2 * padding, W + 2 * padding
    OH = (Hp - KH) // stride + 1
    OW = (Wp - KW) // stride + 1

    CP = _round_up(C, 8)           # per-tap contraction sublanes (bf16 rhs)
    OC_OUT = _round_up(OC, 8)      # f32 result / output channel rows
    OCP_W = _round_up(OC, 16)      # bf16 weight-operand sublanes (16-native)

    # Flat per-image output coordinates use the *padded* row stride Wp so every
    # tap is a pure static shift; the stride-1 conv is computed at all Hp*Wp
    # positions (garbage at pad rows/cols is excluded from the stats by the
    # mask and sliced away afterwards).
    j_need = Hp * Wp
    tj_eff = min(_round_up(j_need, 128), _round_up(tj, 128))
    n_inner = -(-j_need // tj_eff)
    Jp = n_inner * tj_eff
    d_max = (KH - 1) * Wp + (KW - 1)
    LIN = _round_up(Jp + d_max, 128)

    # Budget guard for the fused, VMEM-resident single-call design.
    resident_bytes = (N * OC_OUT * Jp * 4          # resident conv/result slab
                      + 2 * CP * LIN * 2           # double-buffered image slab
                      + Jp * 4                     # validity mask
                      + KH * KW * OCP_W * CP * 2 + 4 * OC_OUT * 4)
    if resident_bytes > 24 * 1024 * 1024 or n_inner > 64:
        # TODO(synk): tiled two-pass (stats pass, then affine pass) fallback for
        # activation slabs that do not fit VMEM / very large spatial extents.
        raise NotImplementedError(
            "activation slab too large for the fused VMEM-resident "
            "Conv+BN+LeakyReLU kernel")

    # ---- wrapper glue: ONE cheap pass over the (un-inflated) activations ----
    xp = jnp.pad(x, ((0, 0), (0, 0), (padding, padding), (padding, padding)))
    xf = xp.reshape(N, C, Hp * Wp).astype(jnp.bfloat16)
    xf = jnp.pad(xf, ((0, 0), (0, CP - C), (0, LIN - Hp * Wp)))

    wt = conv_w.transpose(2, 3, 0, 1).reshape(KH * KW, OC, C).astype(jnp.bfloat16)
    wt = jnp.pad(wt, ((0, 0), (0, OCP_W - OC), (0, CP - C)))

    valid = jnp.zeros((Hp, Wp), jnp.float32)
    valid = valid.at[0:(OH - 1) * stride + 1:stride,
                     0:(OW - 1) * stride + 1:stride].set(1.0)
    mask = jnp.pad(valid.reshape(1, 1, Hp * Wp),
                   ((0, 0), (0, 0), (0, Jp - Hp * Wp)))

    gamma_p = jnp.pad(gamma.astype(jnp.float32),
                      (0, OC_OUT - OC)).reshape(1, OC_OUT, 1)
    beta_p = jnp.pad(beta.astype(jnp.float32),
                     (0, OC_OUT - OC)).reshape(1, OC_OUT, 1)

    taps = tuple((kh, kw) for kh in range(KH) for kw in range(KW))
    kernel = functools.partial(
        _fused_conv_bn_lrelu_kernel, taps=taps, wp=Wp, tj=tj_eff,
        n_inner=n_inner, oc_out=OC_OUT, m_count=N * OH * OW, eps=eps, relu=relu)

    out = pl.pallas_call(
        kernel,
        out_shape=jax.ShapeDtypeStruct((N, OC_OUT, Jp), jnp.float32),
        grid_spec=pltpu.PrefetchScalarGridSpec(
            num_scalar_prefetch=0,
            grid=(N,),
            in_specs=[
                pl.BlockSpec((KH * KW, OCP_W, CP), lambda n: (0, 0, 0)),  # weights
                pl.BlockSpec((1, CP, LIN), lambda n: (n, 0, 0)),          # image n
                pl.BlockSpec((1, 1, Jp), lambda n: (0, 0, 0)),            # mask
                pl.BlockSpec((1, OC_OUT, 1), lambda n: (0, 0, 0)),        # gamma
                pl.BlockSpec((1, OC_OUT, 1), lambda n: (0, 0, 0)),        # beta
            ],
            out_specs=pl.BlockSpec((N, OC_OUT, Jp), lambda n: (0, 0, 0)),
        ),
        compiler_params=pltpu.CompilerParams(
            # Resident output / stat accumulator across the image axis =>
            # "arbitrary".  TODO(synk): per-core partial stats for v7x megacore.
            dimension_semantics=("arbitrary",),
        ),
    )(wt, xf, mask, gamma_p, beta_p)

    # ---- extract the valid (strided) output window:  (N, OC, OH, OW) ----
    y = out[:, :OC, :Hp * Wp].reshape(N, OC, Hp, Wp)
    return y[:, :, 0:(OH - 1) * stride + 1:stride,
             0:(OW - 1) * stride + 1:stride]


def _reference(x, conv_w, gamma, beta, *, stride, padding, relu=True, eps=1e-5,
               bf16_matmul=False):
    if bf16_matmul:
        xc = x.astype(jnp.bfloat16)
        wc = conv_w.astype(jnp.bfloat16)
    else:
        xc, wc = x, conv_w
    y = jax.lax.conv_general_dilated(
        xc, wc, (stride, stride), [(padding, padding), (padding, padding)],
        dimension_numbers=("NCHW", "OIHW", "NCHW"),
        preferred_element_type=jnp.float32,
    )
    mean = y.mean(axis=(0, 2, 3), keepdims=True)
    var = y.var(axis=(0, 2, 3), keepdims=True)  # biased, like BN training mode
    z = (y - mean) * jax.lax.rsqrt(var + eps)
    z = z * gamma[None, :, None, None] + beta[None, :, None, None]
    return jnp.where(z > 0, z, 0.1 * z) if relu else z


if __name__ == "__main__":
    # Module config: Conv2d_BatchNorm(in_channels=4, out_channels=8,
    #                                 kernel_size=3, stride=1, relu=True,
    #                                 same_padding=True)
    N, C, H, W = 2, 4, 16, 16
    OC, KS, STRIDE = 8, 3, 1
    PAD = (KS - 1) // 2  # same_padding=True

    key = jax.random.PRNGKey(0)
    kx, kw, kg, kb = jax.random.split(key, 4)
    x = jax.random.normal(kx, (N, C, H, W), jnp.float32)
    conv_w = jax.random.normal(kw, (OC, C, KS, KS), jnp.float32) * 0.1
    gamma = jax.random.normal(kg, (OC,), jnp.float32) * 0.1 + 1.0
    beta = jax.random.normal(kb, (OC,), jnp.float32) * 0.1

    out = conv2d_batchnorm(x, conv_w, gamma, beta,
                           stride=STRIDE, padding=PAD, relu=True)
    out = jax.block_until_ready(out)
    assert out.shape == (N, OC, H, W), out.shape

    # Matched-precision reference (bf16 conv operands, f32 accumulation) —
    # should agree tightly with the kernel.
    ref_bf = _reference(x, conv_w, gamma, beta, stride=STRIDE, padding=PAD,
                        bf16_matmul=True)
    # Full-f32 reference — difference bounded by bf16 operand rounding.
    ref_32 = _reference(x, conv_w, gamma, beta, stride=STRIDE, padding=PAD)

    err_bf = float(jnp.max(jnp.abs(out - ref_bf)))
    err_32 = float(jnp.max(jnp.abs(out - ref_32)))
    assert jnp.allclose(out, ref_bf, atol=5e-3, rtol=5e-3), err_bf
    assert jnp.allclose(out, ref_32, atol=3e-2, rtol=3e-2), err_32
    print("KERNEL_OK")
</pallas_src>

<mosaic_0001>
module attributes {stable_mosaic.version = 11 : i64} {
  func.func @_fused_conv_bn_lrelu_kernel(%arg0: i32, %arg1: memref<9x16x8xbf16, #tpu.memory_space<vmem>>, %arg2: memref<1x8x512xbf16, #tpu.memory_space<vmem>>, %arg3: memref<1x1x384xf32, #tpu.memory_space<vmem>>, %arg4: memref<1x8x1xf32, #tpu.memory_space<vmem>>, %arg5: memref<1x8x1xf32, #tpu.memory_space<vmem>>, %arg6: memref<2x8x384xf32, #tpu.memory_space<vmem>>) attributes {dimension_semantics = [#tpu.dimension_semantics<arbitrary>], iteration_bounds = array<i64: 2>, scalar_prefetch = 0 : i64, scratch_operands = 0 : i64, tpu.core_type = #tpu.core_type<tc>, window_params = [{pipeline_mode = #tpu.pipeline_mode<synchronous>, transform_indices = @transform_0, window_bounds = array<i64: 9, 16, 8>}, {transform_indices = @transform_1, window_bounds = array<i64: 1, 8, 512>}, {pipeline_mode = #tpu.pipeline_mode<synchronous>, transform_indices = @transform_2, window_bounds = array<i64: 1, 1, 384>}, {pipeline_mode = #tpu.pipeline_mode<synchronous>, transform_indices = @transform_3, window_bounds = array<i64: 1, 8, 1>}, {pipeline_mode = #tpu.pipeline_mode<synchronous>, transform_indices = @transform_4, window_bounds = array<i64: 1, 8, 1>}, {pipeline_mode = #tpu.pipeline_mode<synchronous>, transform_indices = @transform_5, window_bounds = array<i64: 2, 8, 384>}]} {
    %cst = arith.constant 0.000000e+00 : f32
    %0 = vector.broadcast %cst : f32 to vector<16x384xf32>
    %c0 = arith.constant 0 : index
    %c0_0 = arith.constant 0 : index
    %c0_1 = arith.constant 0 : index
    %1 = vector.load %arg2[%c0, %c0_0, %c0_1] : memref<1x8x512xbf16, #tpu.memory_space<vmem>>, vector<1x8x384xbf16>
    %2 = vector.shape_cast %1 : vector<1x8x384xbf16> to vector<8x384xbf16>
    %c0_2 = arith.constant 0 : index
    %c0_3 = arith.constant 0 : index
    %c0_4 = arith.constant 0 : index
    %3 = vector.load %arg1[%c0_2, %c0_3, %c0_4] : memref<9x16x8xbf16, #tpu.memory_space<vmem>>, vector<1x16x8xbf16>
    %4 = vector.shape_cast %3 : vector<1x16x8xbf16> to vector<16x8xbf16>
    %cst_5 = arith.constant dense<0.000000e+00> : vector<16x384xf32>
    %5 = tpu.matmul %4, %2, %cst_5 {dimension_numbers = #tpu.dot_dimension_numbers<[1], [0], [0], [1], [0, 0, 1, 1], [], []>} : vector<16x8xbf16>, vector<8x384xbf16>, vector<16x384xf32> -> vector<16x384xf32>
    %6 = arith.addf %0, %5 : vector<16x384xf32>
    %c0_6 = arith.constant 0 : index
    %c0_7 = arith.constant 0 : index
    %c1 = arith.constant 1 : index
    %7 = vector.load %arg2[%c0_6, %c0_7, %c1] : memref<1x8x512xbf16, #tpu.memory_space<vmem>>, vector<1x8x384xbf16>
    %8 = vector.shape_cast %7 : vector<1x8x384xbf16> to vector<8x384xbf16>
    %c1_8 = arith.constant 1 : index
    %c0_9 = arith.constant 0 : index
    %c0_10 = arith.constant 0 : index
    %9 = vector.load %arg1[%c1_8, %c0_9, %c0_10] : memref<9x16x8xbf16, #tpu.memory_space<vmem>>, vector<1x16x8xbf16>
    %10 = vector.shape_cast %9 : vector<1x16x8xbf16> to vector<16x8xbf16>
    %cst_11 = arith.constant dense<0.000000e+00> : vector<16x384xf32>
    %11 = tpu.matmul %10, %8, %cst_11 {dimension_numbers = #tpu.dot_dimension_numbers<[1], [0], [0], [1], [0, 0, 1, 1], [], []>} : vector<16x8xbf16>, vector<8x384xbf16>, vector<16x384xf32> -> vector<16x384xf32>
    %12 = arith.addf %6, %11 : vector<16x384xf32>
    %c0_12 = arith.constant 0 : index
    %c0_13 = arith.constant 0 : index
    %c2 = arith.constant 2 : index
    %13 = vector.load %arg2[%c0_12, %c0_13, %c2] : memref<1x8x512xbf16, #tpu.memory_space<vmem>>, vector<1x8x384xbf16>
    %14 = vector.shape_cast %13 : vector<1x8x384xbf16> to vector<8x384xbf16>
    %c2_14 = arith.constant 2 : index
    %c0_15 = arith.constant 0 : index
    %c0_16 = arith.constant 0 : index
    %15 = vector.load %arg1[%c2_14, %c0_15, %c0_16] : memref<9x16x8xbf16, #tpu.memory_space<vmem>>, vector<1x16x8xbf16>
    %16 = vector.shape_cast %15 : vector<1x16x8xbf16> to vector<16x8xbf16>
    %cst_17 = arith.constant dense<0.000000e+00> : vector<16x384xf32>
    %17 = tpu.matmul %16, %14, %cst_17 {dimension_numbers = #tpu.dot_dimension_numbers<[1], [0], [0], [1], [0, 0, 1, 1], [], []>} : vector<16x8xbf16>, vector<8x384xbf16>, vector<16x384xf32> -> vector<16x384xf32>
    %18 = arith.addf %12, %17 : vector<16x384xf32>
    %c0_18 = arith.constant 0 : index
    %c0_19 = arith.constant 0 : index
    %c18 = arith.constant 18 : index
    %19 = vector.load %arg2[%c0_18, %c0_19, %c18] : memref<1x8x512xbf16, #tpu.memory_space<vmem>>, vector<1x8x384xbf16>
    %20 = vector.shape_cast %19 : vector<1x8x384xbf16> to vector<8x384xbf16>
    %c3 = arith.constant 3 : index
    %c0_20 = arith.constant 0 : index
    %c0_21 = arith.constant 0 : index
    %21 = vector.load %arg1[%c3, %c0_20, %c0_21] : memref<9x16x8xbf16, #tpu.memory_space<vmem>>, vector<1x16x8xbf16>
    %22 = vector.shape_cast %21 : vector<1x16x8xbf16> to vector<16x8xbf16>
    %cst_22 = arith.constant dense<0.000000e+00> : vector<16x384xf32>
    %23 = tpu.matmul %22, %20, %cst_22 {dimension_numbers = #tpu.dot_dimension_numbers<[1], [0], [0], [1], [0, 0, 1, 1], [], []>} : vector<16x8xbf16>, vector<8x384xbf16>, vector<16x384xf32> -> vector<16x384xf32>
    %24 = arith.addf %18, %23 : vector<16x384xf32>
    %c0_23 = arith.constant 0 : index
    %c0_24 = arith.constant 0 : index
    %c19 = arith.constant 19 : index
    %25 = vector.load %arg2[%c0_23, %c0_24, %c19] : memref<1x8x512xbf16, #tpu.memory_space<vmem>>, vector<1x8x384xbf16>
    %26 = vector.shape_cast %25 : vector<1x8x384xbf16> to vector<8x384xbf16>
    %c4 = arith.constant 4 : index
    %c0_25 = arith.constant 0 : index
    %c0_26 = arith.constant 0 : index
    %27 = vector.load %arg1[%c4, %c0_25, %c0_26] : memref<9x16x8xbf16, #tpu.memory_space<vmem>>, vector<1x16x8xbf16>
    %28 = vector.shape_cast %27 : vector<1x16x8xbf16> to vector<16x8xbf16>
    %cst_27 = arith.constant dense<0.000000e+00> : vector<16x384xf32>
    %29 = tpu.matmul %28, %26, %cst_27 {dimension_numbers = #tpu.dot_dimension_numbers<[1], [0], [0], [1], [0, 0, 1, 1], [], []>} : vector<16x8xbf16>, vector<8x384xbf16>, vector<16x384xf32> -> vector<16x384xf32>
    %30 = arith.addf %24, %29 : vector<16x384xf32>
    %c0_28 = arith.constant 0 : index
    %c0_29 = arith.constant 0 : index
    %c20 = arith.constant 20 : index
    %31 = vector.load %arg2[%c0_28, %c0_29, %c20] : memref<1x8x512xbf16, #tpu.memory_space<vmem>>, vector<1x8x384xbf16>
    %32 = vector.shape_cast %31 : vector<1x8x384xbf16> to vector<8x384xbf16>
    %c5 = arith.constant 5 : index
    %c0_30 = arith.constant 0 : index
    %c0_31 = arith.constant 0 : index
    %33 = vector.load %arg1[%c5, %c0_30, %c0_31] : memref<9x16x8xbf16, #tpu.memory_space<vmem>>, vector<1x16x8xbf16>
    %34 = vector.shape_cast %33 : vector<1x16x8xbf16> to vector<16x8xbf16>
    %cst_32 = arith.constant dense<0.000000e+00> : vector<16x384xf32>
    %35 = tpu.matmul %34, %32, %cst_32 {dimension_numbers = #tpu.dot_dimension_numbers<[1], [0], [0], [1], [0, 0, 1, 1], [], []>} : vector<16x8xbf16>, vector<8x384xbf16>, vector<16x384xf32> -> vector<16x384xf32>
    %36 = arith.addf %30, %35 : vector<16x384xf32>
    %c0_33 = arith.constant 0 : index
    %c0_34 = arith.constant 0 : index
    %c36 = arith.constant 36 : index
    %37 = vector.load %arg2[%c0_33, %c0_34, %c36] : memref<1x8x512xbf16, #tpu.memory_space<vmem>>, vector<1x8x384xbf16>
    %38 = vector.shape_cast %37 : vector<1x8x384xbf16> to vector<8x384xbf16>
    %c6 = arith.constant 6 : index
    %c0_35 = arith.constant 0 : index
    %c0_36 = arith.constant 0 : index
    %39 = vector.load %arg1[%c6, %c0_35, %c0_36] : memref<9x16x8xbf16, #tpu.memory_space<vmem>>, vector<1x16x8xbf16>
    %40 = vector.shape_cast %39 : vector<1x16x8xbf16> to vector<16x8xbf16>
    %cst_37 = arith.constant dense<0.000000e+00> : vector<16x384xf32>
    %41 = tpu.matmul %40, %38, %cst_37 {dimension_numbers = #tpu.dot_dimension_numbers<[1], [0], [0], [1], [0, 0, 1, 1], [], []>} : vector<16x8xbf16>, vector<8x384xbf16>, vector<16x384xf32> -> vector<16x384xf32>
    %42 = arith.addf %36, %41 : vector<16x384xf32>
    %c0_38 = arith.constant 0 : index
    %c0_39 = arith.constant 0 : index
    %c37 = arith.constant 37 : index
    %43 = vector.load %arg2[%c0_38, %c0_39, %c37] : memref<1x8x512xbf16, #tpu.memory_space<vmem>>, vector<1x8x384xbf16>
    %44 = vector.shape_cast %43 : vector<1x8x384xbf16> to vector<8x384xbf16>
    %c7 = arith.constant 7 : index
    %c0_40 = arith.constant 0 : index
    %c0_41 = arith.constant 0 : index
    %45 = vector.load %arg1[%c7, %c0_40, %c0_41] : memref<9x16x8xbf16, #tpu.memory_space<vmem>>, vector<1x16x8xbf16>
    %46 = vector.shape_cast %45 : vector<1x16x8xbf16> to vector<16x8xbf16>
    %cst_42 = arith.constant dense<0.000000e+00> : vector<16x384xf32>
    %47 = tpu.matmul %46, %44, %cst_42 {dimension_numbers = #tpu.dot_dimension_numbers<[1], [0], [0], [1], [0, 0, 1, 1], [], []>} : vector<16x8xbf16>, vector<8x384xbf16>, vector<16x384xf32> -> vector<16x384xf32>
    %48 = arith.addf %42, %47 : vector<16x384xf32>
    %c0_43 = arith.constant 0 : index
    %c0_44 = arith.constant 0 : index
    %c38 = arith.constant 38 : index
    %49 = vector.load %arg2[%c0_43, %c0_44, %c38] : memref<1x8x512xbf16, #tpu.memory_space<vmem>>, vector<1x8x384xbf16>
    %50 = vector.shape_cast %49 : vector<1x8x384xbf16> to vector<8x384xbf16>
    %c8 = arith.constant 8 : index
    %c0_45 = arith.constant 0 : index
    %c0_46 = arith.constant 0 : index
    %51 = vector.load %arg1[%c8, %c0_45, %c0_46] : memref<9x16x8xbf16, #tpu.memory_space<vmem>>, vector<1x16x8xbf16>
    %52 = vector.shape_cast %51 : vector<1x16x8xbf16> to vector<16x8xbf16>
    %cst_47 = arith.constant dense<0.000000e+00> : vector<16x384xf32>
    %53 = tpu.matmul %52, %50, %cst_47 {dimension_numbers = #tpu.dot_dimension_numbers<[1], [0], [0], [1], [0, 0, 1, 1], [], []>} : vector<16x8xbf16>, vector<8x384xbf16>, vector<16x384xf32> -> vector<16x384xf32>
    %54 = arith.addf %48, %53 : vector<16x384xf32>
    %55 = vector.extract_strided_slice %54 {offsets = [0, 0], sizes = [8, 384], strides = [1, 1]} : vector<16x384xf32> to vector<8x384xf32>
    %56 = arith.index_cast %arg0 : i32 to index
    %c0_48 = arith.constant 0 : index
    %c0_49 = arith.constant 0 : index
    %57 = vector.load %arg6[%56, %c0_48, %c0_49] : memref<2x8x384xf32, #tpu.memory_space<vmem>>, vector<1x8x384xf32>
    %58 = vector.shape_cast %57 : vector<1x8x384xf32> to vector<8x384xf32>
    %59 = vector.shape_cast %55 : vector<8x384xf32> to vector<1x8x384xf32>
    tpu.vector_store %arg6[%56, %c0_48, %c0_49], %59 {strides = array<i32>} : memref<2x8x384xf32, #tpu.memory_space<vmem>>, vector<1x8x384xf32>,
    %c1_i32 = arith.constant 1 : i32
    %60 = arith.cmpi eq, %arg0, %c1_i32 : i32
    %61 = arith.extui %60 : i1 to i32
    %c0_i32 = arith.constant 0 : i32
    %62 = arith.cmpi ne, %61, %c0_i32 : i32
    scf.if %62 {
      %c0_50 = arith.constant 0 : index
      %c0_51 = arith.constant 0 : index
      %c0_52 = arith.constant 0 : index
      %63 = vector.load %arg6[%c0_50, %c0_51, %c0_52] : memref<2x8x384xf32, #tpu.memory_space<vmem>>, vector<2x8x384xf32>
      %c0_53 = arith.constant 0 : index
      %c0_54 = arith.constant 0 : index
      %c0_55 = arith.constant 0 : index
      %64 = vector.load %arg3[%c0_53, %c0_54, %c0_55] : memref<1x1x384xf32, #tpu.memory_space<vmem>>, vector<1x1x384xf32>
      %65 = vector.broadcast %64 : vector<1x1x384xf32> to vector<2x8x384xf32>
      %66 = arith.mulf %63, %65 : vector<2x8x384xf32>
      %cst_56 = arith.constant dense<0.000000e+00> : vector<2x8xf32>
      %67 = vector.multi_reduction <add>, %66, %cst_56 [2] : vector<2x8x384xf32> to vector<2x8xf32>
      %68 = vector.shape_cast %67 : vector<2x8xf32> to vector<2x8x1xf32>
      %cst_57 = arith.constant dense<0.000000e+00> : vector<8x1xf32>
      %69 = vector.multi_reduction <add>, %68, %cst_57 [0] : vector<2x8x1xf32> to vector<8x1xf32>
      %70 = vector.shape_cast %69 : vector<8x1xf32> to vector<1x8x1xf32>
      %cst_58 = arith.constant 0.001953125 : f32
      %71 = vector.broadcast %cst_58 : f32 to vector<1x8x1xf32>
      %72 = arith.mulf %70, %71 : vector<1x8x1xf32>
      %73 = vector.broadcast %72 : vector<1x8x1xf32> to vector<2x8x384xf32>
      %74 = arith.subf %63, %73 : vector<2x8x384xf32>
      %75 = vector.broadcast %64 : vector<1x1x384xf32> to vector<2x8x384xf32>
      %76 = arith.mulf %74, %75 : vector<2x8x384xf32>
      %77 = arith.mulf %76, %76 : vector<2x8x384xf32>
      %cst_59 = arith.constant dense<0.000000e+00> : vector<2x8xf32>
      %78 = vector.multi_reduction <add>, %77, %cst_59 [2] : vector<2x8x384xf32> to vector<2x8xf32>
      %79 = vector.shape_cast %78 : vector<2x8xf32> to vector<2x8x1xf32>
      %cst_60 = arith.constant dense<0.000000e+00> : vector<8x1xf32>
      %80 = vector.multi_reduction <add>, %79, %cst_60 [0] : vector<2x8x1xf32> to vector<8x1xf32>
      %81 = vector.shape_cast %80 : vector<8x1xf32> to vector<1x8x1xf32>
      %cst_61 = arith.constant 0.001953125 : f32
      %82 = vector.broadcast %cst_61 : f32 to vector<1x8x1xf32>
      %83 = arith.mulf %81, %82 : vector<1x8x1xf32>
      %c0_62 = arith.constant 0 : index
      %c0_63 = arith.constant 0 : index
      %c0_64 = arith.constant 0 : index
      %84 = vector.load %arg4[%c0_62, %c0_63, %c0_64] : memref<1x8x1xf32, #tpu.memory_space<vmem>>, vector<1x8x1xf32>
      %cst_65 = arith.constant 9.99999974E-6 : f32
      %85 = vector.broadcast %cst_65 : f32 to vector<1x8x1xf32>
      %86 = arith.addf %83, %85 : vector<1x8x1xf32>
      %87 = math.rsqrt %86 : vector<1x8x1xf32>
      %88 = arith.mulf %84, %87 : vector<1x8x1xf32>
      %c0_66 = arith.constant 0 : index
      %c0_67 = arith.constant 0 : index
      %c0_68 = arith.constant 0 : index
      %89 = vector.load %arg5[%c0_66, %c0_67, %c0_68] : memref<1x8x1xf32, #tpu.memory_space<vmem>>, vector<1x8x1xf32>
      %90 = arith.mulf %72, %88 : vector<1x8x1xf32>
      %91 = arith.subf %89, %90 : vector<1x8x1xf32>
      %92 = vector.broadcast %88 : vector<1x8x1xf32> to vector<2x8x384xf32>
      %93 = arith.mulf %63, %92 : vector<2x8x384xf32>
      %94 = vector.broadcast %91 : vector<1x8x1xf32> to vector<2x8x384xf32>
      %95 = arith.addf %93, %94 : vector<2x8x384xf32>
      %cst_69 = arith.constant 1.000000e-01 : f32
      %96 = vector.broadcast %cst_69 : f32 to vector<2x8x384xf32>
      %97 = arith.mulf %96, %95 : vector<2x8x384xf32>
      %98 = arith.maximumf %95, %97 : vector<2x8x384xf32>
      %c0_70 = arith.constant 0 : index
      %c0_71 = arith.constant 0 : index
      %c0_72 = arith.constant 0 : index
      %99 = vector.load %arg6[%c0_70, %c0_71, %c0_72] : memref<2x8x384xf32, #tpu.memory_space<vmem>>, vector<2x8x384xf32>
      tpu.vector_store %arg6[%c0_70, %c0_71, %c0_72], %98 {strides = array<i32>} : memref<2x8x384xf32, #tpu.memory_space<vmem>>, vector<2x8x384xf32>,
    } else {
    }
    return
  }
  func.func @transform_0(%arg0: i32) -> (i32, i32, i32) {
    %c0_i32 = arith.constant 0 : i32
    %c0_i32_0 = arith.constant 0 : i32
    %c0_i32_1 = arith.constant 0 : i32
    %c0_i32_2 = arith.constant 0 : i32
    return %c0_i32, %c0_i32_0, %c0_i32_1 : i32, i32, i32
  }
  func.func @transform_1(%arg0: i32) -> (i32, i32, i32) {
    %c0_i32 = arith.constant 0 : i32
    %c0_i32_0 = arith.constant 0 : i32
    %c0_i32_1 = arith.constant 0 : i32
    return %arg0, %c0_i32, %c0_i32_0 : i32, i32, i32
  }
  func.func @transform_2(%arg0: i32) -> (i32, i32, i32) {
    %c0_i32 = arith.constant 0 : i32
    %c0_i32_0 = arith.constant 0 : i32
    %c0_i32_1 = arith.constant 0 : i32
    %c0_i32_2 = arith.constant 0 : i32
    return %c0_i32, %c0_i32_0, %c0_i32_1 : i32, i32, i32
  }
  func.func @transform_3(%arg0: i32) -> (i32, i32, i32) {
    %c0_i32 = arith.constant 0 : i32
    %c0_i32_0 = arith.constant 0 : i32
    %c0_i32_1 = arith.constant 0 : i32
    %c0_i32_2 = arith.constant 0 : i32
    return %c0_i32, %c0_i32_0, %c0_i32_1 : i32, i32, i32
  }
  func.func @transform_4(%arg0: i32) -> (i32, i32, i32) {
    %c0_i32 = arith.constant 0 : i32
    %c0_i32_0 = arith.constant 0 : i32
    %c0_i32_1 = arith.constant 0 : i32
    %c0_i32_2 = arith.constant 0 : i32
    return %c0_i32, %c0_i32_0, %c0_i32_1 : i32, i32, i32
  }
  func.func @transform_5(%arg0: i32) -> (i32, i32, i32) {
    %c0_i32 = arith.constant 0 : i32
    %c0_i32_0 = arith.constant 0 : i32
    %c0_i32_1 = arith.constant 0 : i32
    %c0_i32_2 = arith.constant 0 : i32
    return %c0_i32, %c0_i32_0, %c0_i32_1 : i32, i32, i32
  }
}

</mosaic_0001>

<llo_original>
// kernel: conv2d_batchnorm.1
$region0: #{conv2d_batchnorm.1}
  #allocation0 [shape = 'u32[]', space=smem, size = 0x4, offset = 0x4, fixed_abs, tag = 'smem constant byte address 0x4 - core index']
  #allocation1 [shape = 'u32[144,128]{1,0:T(1,128)}', space=vmem, size = 0x12000, scoped, tag = 'internal scratch']
  %s0 = inlined_call_operand.vmem [shape: bf16[9,16,8], index: 0, kind: input, shape index: {}]
  %s1 = inlined_call_operand.vmem [shape: bf16[2,8,512], index: 1, kind: input, shape index: {}]
  %s2 = inlined_call_operand.vmem [shape: f32[1,1,384], index: 2, kind: input, shape index: {}]
  %s3 = inlined_call_operand.vmem [shape: f32[1,8,1], index: 3, kind: input, shape index: {}]
  %s4 = inlined_call_operand.vmem [shape: f32[1,8,1], index: 4, kind: input, shape index: {}]
  %s5 = inlined_call_operand.vmem [shape: f32[2,8,384], index: 5, kind: output, shape index: {}]
  %s6 = sld [smem:[#allocation0]]
  $region57: #{conv2d_batchnorm.1} parent=0
    _
  %s8 = ssub.s32 1, %s6
  %s9 = scalar_select 0, %s8, %s6
  loop: start=0, step=1, limit=4
  $region2: #{conv2d_batchnorm.1} parent=0 // loop_pre_header
    _
  $region3: #{conv2d_batchnorm.1} parent=0 // loop_header
    %s11 = sphi 0, %s15
    %p12 = scmp.ge.s32.totalorder %s11, 4
    %s19 = sphi 0, %s19
    %s21 = sphi 0, %s19
    %s22 = sphi 0, %s21
    %s36 = sphi 0, %s22
    %s42 = sphi 0, %s44
    %s45 = sphi 0, %s42
    %s46 = sphi 0, %s45
    %s62 = sphi 0, %s46
    %s66 = sphi 0, %s66
    %s68 = sphi 0, %s66
    %s69 = sphi 0, %s68
    %s83 = sphi 0, %s69
    %s87 = sphi 0, %s87
    %s89 = sphi 0, %s87
    %s90 = sphi 0, %s89
    %s104 = sphi 0, %s90
    %s108 = sphi 0, %s108
    %s110 = sphi 0, %s108
    %s111 = sphi 0, %s110
    %s125 = sphi 0, %s111
    %s129 = sphi 0, %s129
    %s131 = sphi 0, %s129
    %s132 = sphi 0, %s131
    %s146 = sphi 0, %s132
  $region4: #{conv2d_batchnorm.1} parent=0 // loop_header_branch
    %14 = sbr.rel (%p12) target = $region8
  $region5: #{conv2d_batchnorm.1} parent=0 // loop_body
    %s16 = ssub.s32 %s11, 1
    %s17 = ssub.s32 %s11, 2
    %s18 = sadd.s32 %s11, 1
    %s20 = sadd.s32 %s19, 1
    %p23 = scmp.eq.s32.totalorder %s11, 1
    %p24 = scmp.ne.s32.totalorder %s19, %s21
    %p25 = scmp.eq.s32.totalorder %s11, 0
    %p26 = por %p24, %p25
    %p27 = scmp.ne.s32.totalorder %s19, %s21
    %p28 = scmp.eq.s32.totalorder %s16, 1
    %p29 = por %p27, %p28
    %p30 = scmp.ne.s32.totalorder %s21, %s22
    %p31 = scmp.eq.s32.totalorder %s16, 0
    %p32 = por %p30, %p31
    %p33 = scmp.ne.s32.totalorder %s21, %s22
    %p34 = scmp.eq.s32.totalorder %s17, 1
    %p35 = por %p33, %p34
    %p37 = scmp.ne.s32.totalorder %s22, %s36
    %p38 = scmp.eq.s32.totalorder %s17, 0
    %p39 = por %p37, %p38
    %s40 = ssub.s32 %s11, %s18
    %p41 = scmp.eq.s32.totalorder %s40, 0
    %s43 = sadd.s32 %s42, 1
    %s44 = scalar_select %p41, %s42, %s43
    %p47 = pneg %p41
    %p48 = scmp.eq.s32.totalorder %s11, 1
    %p49 = por %p47, %p48
    %p50 = scmp.ne.s32.totalorder %s42, %s45
    %p51 = scmp.eq.s32.totalorder %s11, 0
    %p52 = por %p50, %p51
    %p53 = scmp.ne.s32.totalorder %s42, %s45
    %p54 = scmp.eq.s32.totalorder %s16, 1
    %p55 = por %p53, %p54
    %p56 = scmp.ne.s32.totalorder %s45, %s46
    %p57 = scmp.eq.s32.totalorder %s16, 0
    %p58 = por %p56, %p57
    %p59 = scmp.ne.s32.totalorder %s45, %s46
    %p60 = scmp.eq.s32.totalorder %s17, 1
    %p61 = por %p59, %p60
    %p63 = scmp.ne.s32.totalorder %s46, %s62
    %p64 = scmp.eq.s32.totalorder %s17, 0
    %p65 = por %p63, %p64
    %s67 = sadd.s32 %s66, 1
    %p70 = scmp.eq.s32.totalorder %s11, 1
    %p71 = scmp.ne.s32.totalorder %s66, %s68
    %p72 = scmp.eq.s32.totalorder %s11, 0
    %p73 = por %p71, %p72
    %p74 = scmp.ne.s32.totalorder %s66, %s68
    %p75 = scmp.eq.s32.totalorder %s16, 1
    %p76 = por %p74, %p75
    %p77 = scmp.ne.s32.totalorder %s68, %s69
    %p78 = scmp.eq.s32.totalorder %s16, 0
    %p79 = por %p77, %p78
    %p80 = scmp.ne.s32.totalorder %s68, %s69
    %p81 = scmp.eq.s32.totalorder %s17, 1
    %p82 = por %p80, %p81
    %p84 = scmp.ne.s32.totalorder %s69, %s83
    %p85 = scmp.eq.s32.totalorder %s17, 0
    %p86 = por %p84, %p85
    %s88 = sadd.s32 %s87, 1
    %p91 = scmp.eq.s32.totalorder %s11, 1
    %p92 = scmp.ne.s32.totalorder %s87, %s89
    %p93 = scmp.eq.s32.totalorder %s11, 0
    %p94 = por %p92, %p93
    %p95 = scmp.ne.s32.totalorder %s87, %s89
    %p96 = scmp.eq.s32.totalorder %s16, 1
    %p97 = por %p95, %p96
    %p98 = scmp.ne.s32.totalorder %s89, %s90
    %p99 = scmp.eq.s32.totalorder %s16, 0
    %p100 = por %p98, %p99
    %p101 = scmp.ne.s32.totalorder %s89, %s90
    %p102 = scmp.eq.s32.totalorder %s17, 1
    %p103 = por %p101, %p102
    %p105 = scmp.ne.s32.totalorder %s90, %s104
    %p106 = scmp.eq.s32.totalorder %s17, 0
    %p107 = por %p105, %p106
    %s109 = sadd.s32 %s108, 1
    %p112 = scmp.eq.s32.totalorder %s11, 1
    %p113 = scmp.ne.s32.totalorder %s108, %s110
    %p114 = scmp.eq.s32.totalorder %s11, 0
    %p115 = por %p113, %p114
    %p116 = scmp.ne.s32.totalorder %s108, %s110
    %p117 = scmp.eq.s32.totalorder %s16, 1
    %p118 = por %p116, %p117
    %p119 = scmp.ne.s32.totalorder %s110, %s111
    %p120 = scmp.eq.s32.totalorder %s16, 0
    %p121 = por %p119, %p120
    %p122 = scmp.ne.s32.totalorder %s110, %s111
    %p123 = scmp.eq.s32.totalorder %s17, 1
    %p124 = por %p122, %p123
    %p126 = scmp.ne.s32.totalorder %s111, %s125
    %p127 = scmp.eq.s32.totalorder %s17, 0
    %p128 = por %p126, %p127
    %s130 = sadd.s32 %s129, 1
    %p133 = scmp.eq.s32.totalorder %s11, 1
    %p134 = scmp.ne.s32.totalorder %s129, %s131
    %p135 = scmp.eq.s32.totalorder %s11, 0
    %p136 = por %p134, %p135
    %p137 = scmp.ne.s32.totalorder %s129, %s131
    %p138 = scmp.eq.s32.totalorder %s16, 1
    %p139 = por %p137, %p138
    %p140 = scmp.ne.s32.totalorder %s131, %s132
    %p141 = scmp.eq.s32.totalorder %s16, 0
    %p142 = por %p140, %p141
    %p143 = scmp.ne.s32.totalorder %s131, %s132
    %p144 = scmp.eq.s32.totalorder %s17, 1
    %p145 = por %p143, %p144
    %p147 = scmp.ne.s32.totalorder %s132, %s146
    %p148 = scmp.eq.s32.totalorder %s17, 0
    %p149 = por %p147, %p148
    %p150 = scmp.le.s32.totalorder 1, %s11
    %p151 = scmp.lt.s32.totalorder %s11, 3
    %p152 = pnand %p150, %p151
    %p153 = pneg %p152
    // Predicated region
    $region9: #{conv2d_batchnorm.1} parent=5 // pred_check
      _
    $region10: #{conv2d_batchnorm.1} parent=5 // pred_check_branch
      %155 = sbr.rel (%p152) target = $region12
    $region11: #{conv2d_batchnorm.1} parent=5 // pred_region
      %s156 = ssub.s32 %s11, 1
      // Predicated region
      $region13: #{conv2d_batchnorm.1} parent=11 // pred_check
        %p157 = pneg %p32
      $region14: #{conv2d_batchnorm.1} parent=11 // pred_check_branch
        %159 = sbr.rel (%p157) target = $region16
      $region15: #{conv2d_batchnorm.1} parent=11 // pred_region
        _
      $region16: #{conv2d_batchnorm.1} parent=11 // pred_fallthru
        _
      // Predicated region
      $region17: #{conv2d_batchnorm.1} parent=11 // pred_check
        %p160 = pneg %p79
      $region18: #{conv2d_batchnorm.1} parent=11 // pred_check_branch
        %162 = sbr.rel (%p160) target = $region20
      $region19: #{conv2d_batchnorm.1} parent=11 // pred_region
        _
      $region20: #{conv2d_batchnorm.1} parent=11 // pred_fallthru
        _
      // Predicated region
      $region21: #{conv2d_batchnorm.1} parent=11 // pred_check
        %p163 = pneg %p100
      $region22: #{conv2d_batchnorm.1} parent=11 // pred_check_branch
        %165 = sbr.rel (%p163) target = $region24
      $region23: #{conv2d_batchnorm.1} parent=11 // pred_region
        _
      $region24: #{conv2d_batchnorm.1} parent=11 // pred_fallthru
        _
      // Predicated region
      $region25: #{conv2d_batchnorm.1} parent=11 // pred_check
        %p166 = pneg %p121
      $region26: #{conv2d_batchnorm.1} parent=11 // pred_check_branch
        %168 = sbr.rel (%p166) target = $region28
      $region27: #{conv2d_batchnorm.1} parent=11 // pred_region
        _
      $region28: #{conv2d_batchnorm.1} parent=11 // pred_fallthru
        _
    $region12: #{conv2d_batchnorm.1} parent=5 // pred_fallthru
      _
    %p169 = scmp.lt.s32.totalorder %s11, 2
    // Predicated region
    $region29: #{conv2d_batchnorm.1} parent=5 // pred_check
      %p170 = pneg %p169
    $region30: #{conv2d_batchnorm.1} parent=5 // pred_check_branch
      %172 = sbr.rel (%p170) target = $region32
    $region31: #{conv2d_batchnorm.1} parent=5 // pred_region
      // Predicated region
      $region33: #{conv2d_batchnorm.1} parent=31 // pred_check
        %p173 = pneg %p52
      $region34: #{conv2d_batchnorm.1} parent=31 // pred_check_branch
        %175 = sbr.rel (%p173) target = $region36
      $region35: #{conv2d_batchnorm.1} parent=31 // pred_region
        %p176 = scmp.lt.s32.totalorder %s11, 1
        %s177 = scalar_select %p176, %s11, 1
        %s178 = smul.addr %s177, 4
        %s179 = smul.addr %s178, 4
        %s180 = scalar_lea.vmem %s1, %s179
      $region36: #{conv2d_batchnorm.1} parent=31 // pred_fallthru
        _
    $region32: #{conv2d_batchnorm.1} parent=5 // pred_fallthru
      _
    %p181 = scmp.le.s32.totalorder 1, %s11
    %p182 = scmp.lt.s32.totalorder %s11, 3
    %p183 = pnand %p181, %p182
    %p184 = pneg %p183
    // Predicated region
    $region37: #{conv2d_batchnorm.1} parent=5 // pred_check
      _
    $region38: #{conv2d_batchnorm.1} parent=5 // pred_check_branch
      %186 = sbr.rel (%p183) target = $region40
    $region39: #{conv2d_batchnorm.1} parent=5 // pred_region
      %s187 = ssub.s32 %s11, 1
      %p188 = pneg %p32
      %p189 = pneg %p29
      %p190 = scmp.lt.s32.totalorder %s16, 1
      %s191 = scalar_select %p190, %s16, 1
      %s192 = smul.addr %s191, 4
      %s193 = smul.addr %s192, 4
      %s194 = scalar_lea.vmem %s1, %s193
      %p195 = pneg %p58
      %p196 = pneg %p55
      %p197 = pneg %p79
      %p198 = pneg %p76
      %p199 = pneg %p100
      %p200 = pneg %p97
      %p201 = pneg %p121
      %p202 = pneg %p118
      %p203 = pneg %p142
      %p204 = pneg %p139
      %p205 = scmp.lt.s32.totalorder %s16, 1
      %s206 = scalar_select %p205, %s16, 1
      %s207 = smul.addr %s206, 4
      %s208 = smul.addr %s207, 4
      %s209 = scalar_lea.vmem %s1, %s208
      %v211 = vld [vmem:[%s209] sm:$0xff]
      %v212 = vld [vmem:[%s209 + $0x8] sm:$0xf]
      %v213 = vld [vmem:[%s0] sm:$0xf]
      %v214 = vld [vmem:[%s0 + $0x4] sm:$0xf]
      %v215 = vld [vmem:[%s209] sm:$0xff]
      %v216 = vld [vmem:[%s209 + $0x8] sm:$0xff]
      %s217 = scalar_lea.vmem %s0, 8
      %v218 = vld [vmem:[%s217] sm:$0xf]
      %v219 = vld [vmem:[%s217 + $0x4] sm:$0xf]
      %v222 = vunpack.c.l.b16 %v218
      %v223 = vunpack.c.l.b16 %v219
      %v224 = vpack.c.b16 %v223, %v222
      %v227 = vunpack.c.l.b16 %v215
      %v228 = vunpack.c.h.b16 %v215
      %v229 = vunpack.c.l.b16 %v216
      %v230 = vunpack.c.h.b16 %v216
      %v231 = vpack.c.b16 %v227, %v227
      %v232 = vpack.c.b16 %v228, %v228
      %v233 = vpack.c.b16 %v229, %v229
      %v234 = vpack.c.b16 %v230, %v230
      %235 = vrot.lane.b32.xlu0 %v231, 127
      %v236 = vpop.permute.xlu0 %235
      %237 = vrot.lane.b32.xlu0 %v232, 127
      %v238 = vpop.permute.xlu0 %237
      %239 = vrot.lane.b32.xlu0 %v233, 127
      %v240 = vpop.permute.xlu0 %239
      %241 = vrot.lane.b32.xlu0 %v234, 127
      %v242 = vpop.permute.xlu0 %241
      %vm243 = vcmask 1039360
      %v244 = vsel %vm243, %v236, %v238
      %v245 = vsel %vm243, %v238, %v240
      %v246 = vsel %vm243, %v240, %v242
      %vm247 = vcmask 64512
      %v249 = vsel %vm247, %v224, 0
      %vm251 = vcmask 1043456
      %v253 = vsel %vm251, %v244, 0
      %v256 = vsel %vm251, %v245, 0
      %v259 = vsel %vm251, %v246, 0
      %261 = vmatprep.subr.bf16.mxu0 0
      %262 = vmatpush1.bf16.msra.mxu0 0
      %263 = vmatprep.subr.bf16.mxu0 0
      %264 = vmatpush1.bf16.msra.mxu0 0
      %265 = vmatprep.subr.bf16.mxu0 0
      %266 = vmatpush1.bf16.msra.mxu0 0
      %267 = vmatprep.subr.bf16.mxu0 0
      %268 = vmatpush1.bf16.msra.mxu0 0
      %269 = vmatprep.subr.bf16.mxu0 0
      %270 = vmatpush1.bf16.msra.mxu0 0
      %271 = vmatprep.subr.bf16.mxu0 0
      %272 = vmatpush1.bf16.msra.mxu0 0
      %273 = vmatprep.subr.bf16.mxu0 0
      %274 = vmatpush1.bf16.msra.mxu0 0
      %275 = vmatprep.subr.bf16.mxu0 %v256
      %276 = vmatpush1.bf16.msra.mxu0 %v253
      %277 = vmatprep.subr.bf16.mxu0 0
      %278 = vmatpush2.bf16.msra.mxu0 0
      %279 = vmatprep.subr.bf16.mxu0 0
      %280 = vmatpush2.bf16.msra.mxu0 0
      %281 = vmatprep.subr.bf16.mxu0 0
      %282 = vmatpush2.bf16.msra.mxu0 0
      %283 = vmatprep.subr.bf16.mxu0 0
      %284 = vmatpush2.bf16.msra.mxu0 0
      %285 = vmatprep.subr.bf16.mxu0 0
      %286 = vmatpush2.bf16.msra.mxu0 0
      %287 = vmatprep.subr.bf16.mxu0 0
      %288 = vmatpush2.bf16.msra.mxu0 0
      %289 = vmatprep.subr.bf16.mxu0 0
      %290 = vmatpush2.bf16.msra.mxu0 0
      %291 = vmatprep.subr.bf16.mxu0 0
      %292 = vmatpush2.bf16.msra.mxu0 0
      %293 = vmatprep.mubr.bf16.mxu0 0
      %294 = vmatmul.mubr.bf16.gmra.mxu0 %v249
      %v295 = vpop.f32.mrf.mxu0
      %v296 = vadd.f32 0.0, %v295
      %v297 = vpop.f32.mrf.mxu0
      %v298 = vadd.f32 0.0, %v297
      %v299 = vpop.f32.mrf.mxu0
      %v300 = vpop.f32.mrf.mxu0
      %301 = vdwg.mxu0
      %302 = vmatprep.subr.bf16.mxu0 0
      %303 = vmatpush1.bf16.msra.mxu0 0
      %304 = vmatprep.subr.bf16.mxu0 0
      %305 = vmatpush1.bf16.msra.mxu0 0
      %306 = vmatprep.subr.bf16.mxu0 0
      %307 = vmatpush1.bf16.msra.mxu0 0
      %308 = vmatprep.subr.bf16.mxu0 0
      %309 = vmatpush1.bf16.msra.mxu0 0
      %310 = vmatprep.subr.bf16.mxu0 0
      %311 = vmatpush1.bf16.msra.mxu0 0
      %312 = vmatprep.subr.bf16.mxu0 0
      %313 = vmatpush1.bf16.msra.mxu0 0
      %314 = vmatprep.subr.bf16.mxu0 0
      %315 = vmatpush1.bf16.msra.mxu0 0
      %316 = vmatprep.subr.bf16.mxu0 0
      %317 = vmatpush1.bf16.msra.mxu0 %v259
      %318 = vmatprep.subr.bf16.mxu0 0
      %319 = vmatpush2.bf16.msra.mxu0 0
      %320 = vmatprep.subr.bf16.mxu0 0
      %321 = vmatpush2.bf16.msra.mxu0 0
      %322 = vmatprep.subr.bf16.mxu0 0
      %323 = vmatpush2.bf16.msra.mxu0 0
      %324 = vmatprep.subr.bf16.mxu0 0
      %325 = vmatpush2.bf16.msra.mxu0 0
      %326 = vmatprep.subr.bf16.mxu0 0
      %327 = vmatpush2.bf16.msra.mxu0 0
      %328 = vmatprep.subr.bf16.mxu0 0
      %329 = vmatpush2.bf16.msra.mxu0 0
      %330 = vmatprep.subr.bf16.mxu0 0
      %331 = vmatpush2.bf16.msra.mxu0 0
      %332 = vmatprep.subr.bf16.mxu0 0
      %333 = vmatpush2.bf16.msra.mxu0 0
      %334 = vmatprep.mubr.bf16.mxu0 0
      %335 = vmatmul.mubr.bf16.gmra.mxu0 %v249
      %v336 = vpop.f32.mrf.mxu0
      %v337 = vadd.f32 0.0, %v336
      %v338 = vpop.f32.mrf.mxu0
      %v339 = vpop.f32.mrf.mxu0
      %v340 = vpop.f32.mrf.mxu0
      %341 = vdwg.mxu0
      %v344 = vunpack.c.l.b16 %v213
      %v345 = vunpack.c.l.b16 %v214
      %v346 = vpack.c.b16 %v345, %v344
      %v349 = vunpack.c.l.b16 %v211
      %v350 = vunpack.c.h.b16 %v211
      %v351 = vunpack.c.l.b16 %v212
      %v352 = vpack.c.b16 %v349, %v349
      %v353 = vpack.c.b16 %v350, %v350
      %v354 = vpack.c.b16 %v351, %v351
      %v356 = vsel %vm247, %v346, 0
      %v359 = vsel %vm251, %v352, 0
      %v362 = vsel %vm251, %v353, 0
      %v365 = vsel %vm251, %v354, 0
      %367 = vmatprep.subr.bf16.mxu0 0
      %368 = vmatpush1.bf16.msra.mxu0 0
      %369 = vmatprep.subr.bf16.mxu0 0
      %370 = vmatpush1.bf16.msra.mxu0 0
      %371 = vmatprep.subr.bf16.mxu0 0
      %372 = vmatpush1.bf16.msra.mxu0 0
      %373 = vmatprep.subr.bf16.mxu0 0
      %374 = vmatpush1.bf16.msra.mxu0 0
      %375 = vmatprep.subr.bf16.mxu0 0
      %376 = vmatpush1.bf16.msra.mxu0 0
      %377 = vmatprep.subr.bf16.mxu0 0
      %378 = vmatpush1.bf16.msra.mxu0 0
      %379 = vmatprep.subr.bf16.mxu0 0
      %380 = vmatpush1.bf16.msra.mxu0 0
      %381 = vmatprep.subr.bf16.mxu0 %v362
      %382 = vmatpush1.bf16.msra.mxu0 %v359
      %383 = vmatprep.subr.bf16.mxu0 0
      %384 = vmatpush2.bf16.msra.mxu0 0
      %385 = vmatprep.subr.bf16.mxu0 0
      %386 = vmatpush2.bf16.msra.mxu0 0
      %387 = vmatprep.subr.bf16.mxu0 0
      %388 = vmatpush2.bf16.msra.mxu0 0
      %389 = vmatprep.subr.bf16.mxu0 0
      %390 = vmatpush2.bf16.msra.mxu0 0
      %391 = vmatprep.subr.bf16.mxu0 0
      %392 = vmatpush2.bf16.msra.mxu0 0
      %393 = vmatprep.subr.bf16.mxu0 0
      %394 = vmatpush2.bf16.msra.mxu0 0
      %395 = vmatprep.subr.bf16.mxu0 0
      %396 = vmatpush2.bf16.msra.mxu0 0
      %397 = vmatprep.subr.bf16.mxu0 0
      %398 = vmatpush2.bf16.msra.mxu0 0
      %399 = vmatprep.mubr.bf16.mxu0 0
      %400 = vmatmul.mubr.bf16.gmra.mxu0 %v356
      %v401 = vpop.f32.mrf.mxu0
      %v402 = vadd.f32 %v296, %v401
      %v403 = vpop.f32.mrf.mxu0
      %v404 = vadd.f32 %v298, %v403
      %v405 = vpop.f32.mrf.mxu0
      %v406 = vpop.f32.mrf.mxu0
      %407 = vdwg.mxu0
      %408 = vmatprep.subr.bf16.mxu0 0
      %409 = vmatpush1.bf16.msra.mxu0 0
      %410 = vmatprep.subr.bf16.mxu0 0
      %411 = vmatpush1.bf16.msra.mxu0 0
      %412 = vmatprep.subr.bf16.mxu0 0
      %413 = vmatpush1.bf16.msra.mxu0 0
      %414 = vmatprep.subr.bf16.mxu0 0
      %415 = vmatpush1.bf16.msra.mxu0 0
      %416 = vmatprep.subr.bf16.mxu0 0
      %417 = vmatpush1.bf16.msra.mxu0 0
      %418 = vmatprep.subr.bf16.mxu0 0
      %419 = vmatpush1.bf16.msra.mxu0 0
      %420 = vmatprep.subr.bf16.mxu0 0
      %421 = vmatpush1.bf16.msra.mxu0 0
      %422 = vmatprep.subr.bf16.mxu0 0
      %423 = vmatpush1.bf16.msra.mxu0 %v365
      %424 = vmatprep.subr.bf16.mxu0 0
      %425 = vmatpush2.bf16.msra.mxu0 0
      %426 = vmatprep.subr.bf16.mxu0 0
      %427 = vmatpush2.bf16.msra.mxu0 0
      %428 = vmatprep.subr.bf16.mxu0 0
      %429 = vmatpush2.bf16.msra.mxu0 0
      %430 = vmatprep.subr.bf16.mxu0 0
      %431 = vmatpush2.bf16.msra.mxu0 0
      %432 = vmatprep.subr.bf16.mxu0 0
      %433 = vmatpush2.bf16.msra.mxu0 0
      %434 = vmatprep.subr.bf16.mxu0 0
      %435 = vmatpush2.bf16.msra.mxu0 0
      %436 = vmatprep.subr.bf16.mxu0 0
      %437 = vmatpush2.bf16.msra.mxu0 0
      %438 = vmatprep.subr.bf16.mxu0 0
      %439 = vmatpush2.bf16.msra.mxu0 0
      %440 = vmatprep.mubr.bf16.mxu0 0
      %441 = vmatmul.mubr.bf16.gmra.mxu0 %v356
      %v442 = vpop.f32.mrf.mxu0
      %v443 = vadd.f32 %v337, %v442
      %v444 = vpop.f32.mrf.mxu0
      %v445 = vpop.f32.mrf.mxu0
      %v446 = vpop.f32.mrf.mxu0
      %447 = vdwg.mxu0
      %s448 = scalar_lea.vmem %s0, 16
      %v449 = vld [vmem:[%s448] sm:$0xf]
      %v450 = vld [vmem:[%s448 + $0x4] sm:$0xf]
      %v453 = vunpack.c.l.b16 %v449
      %v454 = vunpack.c.l.b16 %v450
      %v455 = vpack.c.b16 %v454, %v453
      %456 = vrot.lane.b32.xlu0 %v231, 126
      %v457 = vpop.permute.xlu0 %456
      %458 = vrot.lane.b32.xlu0 %v232, 126
      %v459 = vpop.permute.xlu0 %458
      %460 = vrot.lane.b32.xlu0 %v233, 126
      %v461 = vpop.permute.xlu0 %460
      %462 = vrot.lane.b32.xlu0 %v234, 126
      %v463 = vpop.permute.xlu0 %462
      %vm464 = vcmask 1031168
      %v465 = vsel %vm464, %v457, %v459
      %v466 = vsel %vm464, %v459, %v461
      %v467 = vsel %vm464, %v461, %v463
      %v469 = vsel %vm247, %v455, 0
      %v472 = vsel %vm251, %v465, 0
      %v475 = vsel %vm251, %v466, 0
      %v478 = vsel %vm251, %v467, 0
      %480 = vmatprep.subr.bf16.mxu0 0
      %481 = vmatpush1.bf16.msra.mxu0 0
      %482 = vmatprep.subr.bf16.mxu0 0
      %483 = vmatpush1.bf16.msra.mxu0 0
      %484 = vmatprep.subr.bf16.mxu0 0
      %485 = vmatpush1.bf16.msra.mxu0 0
      %486 = vmatprep.subr.bf16.mxu0 0
      %487 = vmatpush1.bf16.msra.mxu0 0
      %488 = vmatprep.subr.bf16.mxu0 0
      %489 = vmatpush1.bf16.msra.mxu0 0
      %490 = vmatprep.subr.bf16.mxu0 0
      %491 = vmatpush1.bf16.msra.mxu0 0
      %492 = vmatprep.subr.bf16.mxu0 0
      %493 = vmatpush1.bf16.msra.mxu0 0
      %494 = vmatprep.subr.bf16.mxu0 %v475
      %495 = vmatpush1.bf16.msra.mxu0 %v472
      %496 = vmatprep.subr.bf16.mxu0 0
      %497 = vmatpush2.bf16.msra.mxu0 0
      %498 = vmatprep.subr.bf16.mxu0 0
      %499 = vmatpush2.bf16.msra.mxu0 0
      %500 = vmatprep.subr.bf16.mxu0 0
      %501 = vmatpush2.bf16.msra.mxu0 0
      %502 = vmatprep.subr.bf16.mxu0 0
      %503 = vmatpush2.bf16.msra.mxu0 0
      %504 = vmatprep.subr.bf16.mxu0 0
      %505 = vmatpush2.bf16.msra.mxu0 0
      %506 = vmatprep.subr.bf16.mxu0 0
      %507 = vmatpush2.bf16.msra.mxu0 0
      %508 = vmatprep.subr.bf16.mxu0 0
      %509 = vmatpush2.bf16.msra.mxu0 0
      %510 = vmatprep.subr.bf16.mxu0 0
      %511 = vmatpush2.bf16.msra.mxu0 0
      %512 = vmatprep.mubr.bf16.mxu0 0
      %513 = vmatmul.mubr.bf16.gmra.mxu0 %v469
      %v514 = vpop.f32.mrf.mxu0
      %v515 = vadd.f32 0.0, %v514
      %v516 = vpop.f32.mrf.mxu0
      %v517 = vadd.f32 0.0, %v516
      %v518 = vpop.f32.mrf.mxu0
      %v519 = vpop.f32.mrf.mxu0
      %520 = vdwg.mxu0
      %521 = vmatprep.subr.bf16.mxu0 0
      %522 = vmatpush1.bf16.msra.mxu0 0
      %523 = vmatprep.subr.bf16.mxu0 0
      %524 = vmatpush1.bf16.msra.mxu0 0
      %525 = vmatprep.subr.bf16.mxu0 0
      %526 = vmatpush1.bf16.msra.mxu0 0
      %527 = vmatprep.subr.bf16.mxu0 0
      %528 = vmatpush1.bf16.msra.mxu0 0
      %529 = vmatprep.subr.bf16.mxu0 0
      %530 = vmatpush1.bf16.msra.mxu0 0
      %531 = vmatprep.subr.bf16.mxu0 0
      %532 = vmatpush1.bf16.msra.mxu0 0
      %533 = vmatprep.subr.bf16.mxu0 0
      %534 = vmatpush1.bf16.msra.mxu0 0
      %535 = vmatprep.subr.bf16.mxu0 0
      %536 = vmatpush1.bf16.msra.mxu0 %v478
      %537 = vmatprep.subr.bf16.mxu0 0
      %538 = vmatpush2.bf16.msra.mxu0 0
      %539 = vmatprep.subr.bf16.mxu0 0
      %540 = vmatpush2.bf16.msra.mxu0 0
      %541 = vmatprep.subr.bf16.mxu0 0
      %542 = vmatpush2.bf16.msra.mxu0 0
      %543 = vmatprep.subr.bf16.mxu0 0
      %544 = vmatpush2.bf16.msra.mxu0 0
      %545 = vmatprep.subr.bf16.mxu0 0
      %546 = vmatpush2.bf16.msra.mxu0 0
      %547 = vmatprep.subr.bf16.mxu0 0
      %548 = vmatpush2.bf16.msra.mxu0 0
      %549 = vmatprep.subr.bf16.mxu0 0
      %550 = vmatpush2.bf16.msra.mxu0 0
      %551 = vmatprep.subr.bf16.mxu0 0
      %552 = vmatpush2.bf16.msra.mxu0 0
      %553 = vmatprep.mubr.bf16.mxu0 0
      %554 = vmatmul.mubr.bf16.gmra.mxu0 %v469
      %v555 = vpop.f32.mrf.mxu0
      %v556 = vadd.f32 0.0, %v555
      %v557 = vpop.f32.mrf.mxu0
      %v558 = vpop.f32.mrf.mxu0
      %v559 = vpop.f32.mrf.mxu0
      %560 = vdwg.mxu0
      %v561 = vadd.f32 %v402, %v515
      %v562 = vadd.f32 %v404, %v517
      %v563 = vadd.f32 %v443, %v556
      %s564 = scalar_lea.vmem %s0, 24
      %v565 = vld [vmem:[%s564] sm:$0xf]
      %v566 = vld [vmem:[%s564 + $0x4] sm:$0xf]
      %v569 = vunpack.c.l.b16 %v565
      %v570 = vunpack.c.l.b16 %v566
      %v571 = vpack.c.b16 %v570, %v569
      %572 = vrot.lane.b32.xlu0 %v231, 110
      %v573 = vpop.permute.xlu0 %572
      %574 = vrot.lane.b32.xlu0 %v232, 110
      %v575 = vpop.permute.xlu0 %574
      %576 = vrot.lane.b32.xlu0 %v233, 110
      %v577 = vpop.permute.xlu0 %576
      %578 = vrot.lane.b32.xlu0 %v234, 110
      %v579 = vpop.permute.xlu0 %578
      %vm580 = vcmask 900096
      %v581 = vsel %vm580, %v573, %v575
      %v582 = vsel %vm580, %v575, %v577
      %v583 = vsel %vm580, %v577, %v579
      %v585 = vsel %vm247, %v571, 0
      %v588 = vsel %vm251, %v581, 0
      %v591 = vsel %vm251, %v582, 0
      %v594 = vsel %vm251, %v583, 0
      %596 = vmatprep.subr.bf16.mxu0 0
      %597 = vmatpush1.bf16.msra.mxu0 0
      %598 = vmatprep.subr.bf16.mxu0 0
      %599 = vmatpush1.bf16.msra.mxu0 0
      %600 = vmatprep.subr.bf16.mxu0 0
      %601 = vmatpush1.bf16.msra.mxu0 0
      %602 = vmatprep.subr.bf16.mxu0 0
      %603 = vmatpush1.bf16.msra.mxu0 0
      %604 = vmatprep.subr.bf16.mxu0 0
      %605 = vmatpush1.bf16.msra.mxu0 0
      %606 = vmatprep.subr.bf16.mxu0 0
      %607 = vmatpush1.bf16.msra.mxu0 0
      %608 = vmatprep.subr.bf16.mxu0 0
      %609 = vmatpush1.bf16.msra.mxu0 0
      %610 = vmatprep.subr.bf16.mxu0 %v591
      %611 = vmatpush1.bf16.msra.mxu0 %v588
      %612 = vmatprep.subr.bf16.mxu0 0
      %613 = vmatpush2.bf16.msra.mxu0 0
      %614 = vmatprep.subr.bf16.mxu0 0
      %615 = vmatpush2.bf16.msra.mxu0 0
      %616 = vmatprep.subr.bf16.mxu0 0
      %617 = vmatpush2.bf16.msra.mxu0 0
      %618 = vmatprep.subr.bf16.mxu0 0
      %619 = vmatpush2.bf16.msra.mxu0 0
      %620 = vmatprep.subr.bf16.mxu0 0
      %621 = vmatpush2.bf16.msra.mxu0 0
      %622 = vmatprep.subr.bf16.mxu0 0
      %623 = vmatpush2.bf16.msra.mxu0 0
      %624 = vmatprep.subr.bf16.mxu0 0
      %625 = vmatpush2.bf16.msra.mxu0 0
      %626 = vmatprep.subr.bf16.mxu0 0
      %627 = vmatpush2.bf16.msra.mxu0 0
      %628 = vmatprep.mubr.bf16.mxu0 0
      %629 = vmatmul.mubr.bf16.gmra.mxu0 %v585
      %v630 = vpop.f32.mrf.mxu0
      %v631 = vadd.f32 0.0, %v630
      %v632 = vpop.f32.mrf.mxu0
      %v633 = vadd.f32 0.0, %v632
      %v634 = vpop.f32.mrf.mxu0
      %v635 = vpop.f32.mrf.mxu0
      %636 = vdwg.mxu0
      %637 = vmatprep.subr.bf16.mxu0 0
      %638 = vmatpush1.bf16.msra.mxu0 0
      %639 = vmatprep.subr.bf16.mxu0 0
      %640 = vmatpush1.bf16.msra.mxu0 0
      %641 = vmatprep.subr.bf16.mxu0 0
      %642 = vmatpush1.bf16.msra.mxu0 0
      %643 = vmatprep.subr.bf16.mxu0 0
      %644 = vmatpush1.bf16.msra.mxu0 0
      %645 = vmatprep.subr.bf16.mxu0 0
      %646 = vmatpush1.bf16.msra.mxu0 0
      %647 = vmatprep.subr.bf16.mxu0 0
      %648 = vmatpush1.bf16.msra.mxu0 0
      %649 = vmatprep.subr.bf16.mxu0 0
      %650 = vmatpush1.bf16.msra.mxu0 0
      %651 = vmatprep.subr.bf16.mxu0 0
      %652 = vmatpush1.bf16.msra.mxu0 %v594
      %653 = vmatprep.subr.bf16.mxu0 0
      %654 = vmatpush2.bf16.msra.mxu0 0
      %655 = vmatprep.subr.bf16.mxu0 0
      %656 = vmatpush2.bf16.msra.mxu0 0
      %657 = vmatprep.subr.bf16.mxu0 0
      %658 = vmatpush2.bf16.msra.mxu0 0
      %659 = vmatprep.subr.bf16.mxu0 0
      %660 = vmatpush2.bf16.msra.mxu0 0
      %661 = vmatprep.subr.bf16.mxu0 0
      %662 = vmatpush2.bf16.msra.mxu0 0
      %663 = vmatprep.subr.bf16.mxu0 0
      %664 = vmatpush2.bf16.msra.mxu0 0
      %665 = vmatprep.subr.bf16.mxu0 0
      %666 = vmatpush2.bf16.msra.mxu0 0
      %667 = vmatprep.subr.bf16.mxu0 0
      %668 = vmatpush2.bf16.msra.mxu0 0
      %669 = vmatprep.mubr.bf16.mxu0 0
      %670 = vmatmul.mubr.bf16.gmra.mxu0 %v585
      %v671 = vpop.f32.mrf.mxu0
      %v672 = vadd.f32 0.0, %v671
      %v673 = vpop.f32.mrf.mxu0
      %v674 = vpop.f32.mrf.mxu0
      %v675 = vpop.f32.mrf.mxu0
      %676 = vdwg.mxu0
      %v677 = vadd.f32 %v561, %v631
      %v678 = vadd.f32 %v562, %v633
      %v679 = vadd.f32 %v563, %v672
      %s680 = scalar_lea.vmem %s0, 32
      %v681 = vld [vmem:[%s680] sm:$0xf]
      %v682 = vld [vmem:[%s680 + $0x4] sm:$0xf]
      %v685 = vunpack.c.l.b16 %v681
      %v686 = vunpack.c.l.b16 %v682
      %v687 = vpack.c.b16 %v686, %v685
      %688 = vrot.lane.b32.xlu0 %v231, 109
      %v689 = vpop.permute.xlu0 %688
      %690 = vrot.lane.b32.xlu0 %v232, 109
      %v691 = vpop.permute.xlu0 %690
      %692 = vrot.lane.b32.xlu0 %v233, 109
      %v693 = vpop.permute.xlu0 %692
      %694 = vrot.lane.b32.xlu0 %v234, 109
      %v695 = vpop.permute.xlu0 %694
      %vm696 = vcmask 891904
      %v697 = vsel %vm696, %v689, %v691
      %v698 = vsel %vm696, %v691, %v693
      %v699 = vsel %vm696, %v693, %v695
      %v701 = vsel %vm247, %v687, 0
      %v704 = vsel %vm251, %v697, 0
      %v707 = vsel %vm251, %v698, 0
      %v710 = vsel %vm251, %v699, 0
      %712 = vmatprep.subr.bf16.mxu0 0
      %713 = vmatpush1.bf16.msra.mxu0 0
      %714 = vmatprep.subr.bf16.mxu0 0
      %715 = vmatpush1.bf16.msra.mxu0 0
      %716 = vmatprep.subr.bf16.mxu0 0
      %717 = vmatpush1.bf16.msra.mxu0 0
      %718 = vmatprep.subr.bf16.mxu0 0
      %719 = vmatpush1.bf16.msra.mxu0 0
      %720 = vmatprep.subr.bf16.mxu0 0
      %721 = vmatpush1.bf16.msra.mxu0 0
      %722 = vmatprep.subr.bf16.mxu0 0
      %723 = vmatpush1.bf16.msra.mxu0 0
      %724 = vmatprep.subr.bf16.mxu0 0
      %725 = vmatpush1.bf16.msra.mxu0 0
      %726 = vmatprep.subr.bf16.mxu0 %v707
      %727 = vmatpush1.bf16.msra.mxu0 %v704
      %728 = vmatprep.subr.bf16.mxu0 0
      %729 = vmatpush2.bf16.msra.mxu0 0
      %730 = vmatprep.subr.bf16.mxu0 0
      %731 = vmatpush2.bf16.msra.mxu0 0
      %732 = vmatprep.subr.bf16.mxu0 0
      %733 = vmatpush2.bf16.msra.mxu0 0
      %734 = vmatprep.subr.bf16.mxu0 0
      %735 = vmatpush2.bf16.msra.mxu0 0
      %736 = vmatprep.subr.bf16.mxu0 0
      %737 = vmatpush2.bf16.msra.mxu0 0
      %738 = vmatprep.subr.bf16.mxu0 0
      %739 = vmatpush2.bf16.msra.mxu0 0
      %740 = vmatprep.subr.bf16.mxu0 0
      %741 = vmatpush2.bf16.msra.mxu0 0
      %742 = vmatprep.subr.bf16.mxu0 0
      %743 = vmatpush2.bf16.msra.mxu0 0
      %744 = vmatprep.mubr.bf16.mxu0 0
      %745 = vmatmul.mubr.bf16.gmra.mxu0 %v701
      %v746 = vpop.f32.mrf.mxu0
      %v747 = vadd.f32 0.0, %v746
      %v748 = vpop.f32.mrf.mxu0
      %v749 = vadd.f32 0.0, %v748
      %v750 = vpop.f32.mrf.mxu0
      %v751 = vpop.f32.mrf.mxu0
      %752 = vdwg.mxu0
      %753 = vmatprep.subr.bf16.mxu0 0
      %754 = vmatpush1.bf16.msra.mxu0 0
      %755 = vmatprep.subr.bf16.mxu0 0
      %756 = vmatpush1.bf16.msra.mxu0 0
      %757 = vmatprep.subr.bf16.mxu0 0
      %758 = vmatpush1.bf16.msra.mxu0 0
      %759 = vmatprep.subr.bf16.mxu0 0
      %760 = vmatpush1.bf16.msra.mxu0 0
      %761 = vmatprep.subr.bf16.mxu0 0
      %762 = vmatpush1.bf16.msra.mxu0 0
      %763 = vmatprep.subr.bf16.mxu0 0
      %764 = vmatpush1.bf16.msra.mxu0 0
      %765 = vmatprep.subr.bf16.mxu0 0
      %766 = vmatpush1.bf16.msra.mxu0 0
      %767 = vmatprep.subr.bf16.mxu0 0
      %768 = vmatpush1.bf16.msra.mxu0 %v710
      %769 = vmatprep.subr.bf16.mxu0 0
      %770 = vmatpush2.bf16.msra.mxu0 0
      %771 = vmatprep.subr.bf16.mxu0 0
      %772 = vmatpush2.bf16.msra.mxu0 0
      %773 = vmatprep.subr.bf16.mxu0 0
      %774 = vmatpush2.bf16.msra.mxu0 0
      %775 = vmatprep.subr.bf16.mxu0 0
      %776 = vmatpush2.bf16.msra.mxu0 0
      %777 = vmatprep.subr.bf16.mxu0 0
      %778 = vmatpush2.bf16.msra.mxu0 0
      %779 = vmatprep.subr.bf16.mxu0 0
      %780 = vmatpush2.bf16.msra.mxu0 0
      %781 = vmatprep.subr.bf16.mxu0 0
      %782 = vmatpush2.bf16.msra.mxu0 0
      %783 = vmatprep.subr.bf16.mxu0 0
      %784 = vmatpush2.bf16.msra.mxu0 0
      %785 = vmatprep.mubr.bf16.mxu0 0
      %786 = vmatmul.mubr.bf16.gmra.mxu0 %v701
      %v787 = vpop.f32.mrf.mxu0
      %v788 = vadd.f32 0.0, %v787
      %v789 = vpop.f32.mrf.mxu0
      %v790 = vpop.f32.mrf.mxu0
      %v791 = vpop.f32.mrf.mxu0
      %792 = vdwg.mxu0
      %v793 = vadd.f32 %v677, %v747
      %v794 = vadd.f32 %v678, %v749
      %v795 = vadd.f32 %v679, %v788
      %s796 = scalar_lea.vmem %s0, 40
      %v797 = vld [vmem:[%s796] sm:$0xf]
      %v798 = vld [vmem:[%s796 + $0x4] sm:$0xf]
      %v801 = vunpack.c.l.b16 %v797
      %v802 = vunpack.c.l.b16 %v798
      %v803 = vpack.c.b16 %v802, %v801
      %804 = vrot.lane.b32.xlu0 %v231, 108
      %v805 = vpop.permute.xlu0 %804
      %806 = vrot.lane.b32.xlu0 %v232, 108
      %v807 = vpop.permute.xlu0 %806
      %808 = vrot.lane.b32.xlu0 %v233, 108
      %v809 = vpop.permute.xlu0 %808
      %810 = vrot.lane.b32.xlu0 %v234, 108
      %v811 = vpop.permute.xlu0 %810
      %vm812 = vcmask 883712
      %v813 = vsel %vm812, %v805, %v807
      %v814 = vsel %vm812, %v807, %v809
      %v815 = vsel %vm812, %v809, %v811
      %v817 = vsel %vm247, %v803, 0
      %v820 = vsel %vm251, %v813, 0
      %v823 = vsel %vm251, %v814, 0
      %v826 = vsel %vm251, %v815, 0
      %828 = vmatprep.subr.bf16.mxu0 0
      %829 = vmatpush1.bf16.msra.mxu0 0
      %830 = vmatprep.subr.bf16.mxu0 0
      %831 = vmatpush1.bf16.msra.mxu0 0
      %832 = vmatprep.subr.bf16.mxu0 0
      %833 = vmatpush1.bf16.msra.mxu0 0
      %834 = vmatprep.subr.bf16.mxu0 0
      %835 = vmatpush1.bf16.msra.mxu0 0
      %836 = vmatprep.subr.bf16.mxu0 0
      %837 = vmatpush1.bf16.msra.mxu0 0
      %838 = vmatprep.subr.bf16.mxu0 0
      %839 = vmatpush1.bf16.msra.mxu0 0
      %840 = vmatprep.subr.bf16.mxu0 0
      %841 = vmatpush1.bf16.msra.mxu0 0
      %842 = vmatprep.subr.bf16.mxu0 %v823
      %843 = vmatpush1.bf16.msra.mxu0 %v820
      %844 = vmatprep.subr.bf16.mxu0 0
      %845 = vmatpush2.bf16.msra.mxu0 0
      %846 = vmatprep.subr.bf16.mxu0 0
      %847 = vmatpush2.bf16.msra.mxu0 0
      %848 = vmatprep.subr.bf16.mxu0 0
      %849 = vmatpush2.bf16.msra.mxu0 0
      %850 = vmatprep.subr.bf16.mxu0 0
      %851 = vmatpush2.bf16.msra.mxu0 0
      %852 = vmatprep.subr.bf16.mxu0 0
      %853 = vmatpush2.bf16.msra.mxu0 0
      %854 = vmatprep.subr.bf16.mxu0 0
      %855 = vmatpush2.bf16.msra.mxu0 0
      %856 = vmatprep.subr.bf16.mxu0 0
      %857 = vmatpush2.bf16.msra.mxu0 0
      %858 = vmatprep.subr.bf16.mxu0 0
      %859 = vmatpush2.bf16.msra.mxu0 0
      %860 = vmatprep.mubr.bf16.mxu0 0
      %861 = vmatmul.mubr.bf16.gmra.mxu0 %v817
      %v862 = vpop.f32.mrf.mxu0
      %v863 = vadd.f32 0.0, %v862
      %v864 = vpop.f32.mrf.mxu0
      %v865 = vadd.f32 0.0, %v864
      %v866 = vpop.f32.mrf.mxu0
      %v867 = vpop.f32.mrf.mxu0
      %868 = vdwg.mxu0
      %869 = vmatprep.subr.bf16.mxu0 0
      %870 = vmatpush1.bf16.msra.mxu0 0
      %871 = vmatprep.subr.bf16.mxu0 0
      %872 = vmatpush1.bf16.msra.mxu0 0
      %873 = vmatprep.subr.bf16.mxu0 0
      %874 = vmatpush1.bf16.msra.mxu0 0
      %875 = vmatprep.subr.bf16.mxu0 0
      %876 = vmatpush1.bf16.msra.mxu0 0
      %877 = vmatprep.subr.bf16.mxu0 0
      %878 = vmatpush1.bf16.msra.mxu0 0
      %879 = vmatprep.subr.bf16.mxu0 0
      %880 = vmatpush1.bf16.msra.mxu0 0
      %881 = vmatprep.subr.bf16.mxu0 0
      %882 = vmatpush1.bf16.msra.mxu0 0
      %883 = vmatprep.subr.bf16.mxu0 0
      %884 = vmatpush1.bf16.msra.mxu0 %v826
      %885 = vmatprep.subr.bf16.mxu0 0
      %886 = vmatpush2.bf16.msra.mxu0 0
      %887 = vmatprep.subr.bf16.mxu0 0
      %888 = vmatpush2.bf16.msra.mxu0 0
      %889 = vmatprep.subr.bf16.mxu0 0
      %890 = vmatpush2.bf16.msra.mxu0 0
      %891 = vmatprep.subr.bf16.mxu0 0
      %892 = vmatpush2.bf16.msra.mxu0 0
      %893 = vmatprep.subr.bf16.mxu0 0
      %894 = vmatpush2.bf16.msra.mxu0 0
      %895 = vmatprep.subr.bf16.mxu0 0
      %896 = vmatpush2.bf16.msra.mxu0 0
      %897 = vmatprep.subr.bf16.mxu0 0
      %898 = vmatpush2.bf16.msra.mxu0 0
      %899 = vmatprep.subr.bf16.mxu0 0
      %900 = vmatpush2.bf16.msra.mxu0 0
      %901 = vmatprep.mubr.bf16.mxu0 0
      %902 = vmatmul.mubr.bf16.gmra.mxu0 %v817
      %v903 = vpop.f32.mrf.mxu0
      %v904 = vadd.f32 0.0, %v903
      %v905 = vpop.f32.mrf.mxu0
      %v906 = vpop.f32.mrf.mxu0
      %v907 = vpop.f32.mrf.mxu0
      %908 = vdwg.mxu0
      %v909 = vadd.f32 %v793, %v863
      %v910 = vadd.f32 %v794, %v865
      %v911 = vadd.f32 %v795, %v904
      %s912 = scalar_lea.vmem %s0, 48
      %v913 = vld [vmem:[%s912] sm:$0xf]
      %v914 = vld [vmem:[%s912 + $0x4] sm:$0xf]
      %v917 = vunpack.c.l.b16 %v913
      %v918 = vunpack.c.l.b16 %v914
      %v919 = vpack.c.b16 %v918, %v917
      %920 = vrot.lane.b32.xlu0 %v231, 92
      %v921 = vpop.permute.xlu0 %920
      %922 = vrot.lane.b32.xlu0 %v232, 92
      %v923 = vpop.permute.xlu0 %922
      %924 = vrot.lane.b32.xlu0 %v233, 92
      %v925 = vpop.permute.xlu0 %924
      %926 = vrot.lane.b32.xlu0 %v234, 92
      %v927 = vpop.permute.xlu0 %926
      %vm928 = vcmask 752640
      %v929 = vsel %vm928, %v921, %v923
      %v930 = vsel %vm928, %v923, %v925
      %v931 = vsel %vm928, %v925, %v927
      %v933 = vsel %vm247, %v919, 0
      %v936 = vsel %vm251, %v929, 0
      %v939 = vsel %vm251, %v930, 0
      %v942 = vsel %vm251, %v931, 0
      %944 = vmatprep.subr.bf16.mxu0 0
      %945 = vmatpush1.bf16.msra.mxu0 0
      %946 = vmatprep.subr.bf16.mxu0 0
      %947 = vmatpush1.bf16.msra.mxu0 0
      %948 = vmatprep.subr.bf16.mxu0 0
      %949 = vmatpush1.bf16.msra.mxu0 0
      %950 = vmatprep.subr.bf16.mxu0 0
      %951 = vmatpush1.bf16.msra.mxu0 0
      %952 = vmatprep.subr.bf16.mxu0 0
      %953 = vmatpush1.bf16.msra.mxu0 0
      %954 = vmatprep.subr.bf16.mxu0 0
      %955 = vmatpush1.bf16.msra.mxu0 0
      %956 = vmatprep.subr.bf16.mxu0 0
      %957 = vmatpush1.bf16.msra.mxu0 0
      %958 = vmatprep.subr.bf16.mxu0 %v939
      %959 = vmatpush1.bf16.msra.mxu0 %v936
      %960 = vmatprep.subr.bf16.mxu0 0
      %961 = vmatpush2.bf16.msra.mxu0 0
      %962 = vmatprep.subr.bf16.mxu0 0
      %963 = vmatpush2.bf16.msra.mxu0 0
      %964 = vmatprep.subr.bf16.mxu0 0
      %965 = vmatpush2.bf16.msra.mxu0 0
      %966 = vmatprep.subr.bf16.mxu0 0
      %967 = vmatpush2.bf16.msra.mxu0 0
      %968 = vmatprep.subr.bf16.mxu0 0
      %969 = vmatpush2.bf16.msra.mxu0 0
      %970 = vmatprep.subr.bf16.mxu0 0
      %971 = vmatpush2.bf16.msra.mxu0 0
      %972 = vmatprep.subr.bf16.mxu0 0
      %973 = vmatpush2.bf16.msra.mxu0 0
      %974 = vmatprep.subr.bf16.mxu0 0
      %975 = vmatpush2.bf16.msra.mxu0 0
      %976 = vmatprep.mubr.bf16.mxu0 0
      %977 = vmatmul.mubr.bf16.gmra.mxu0 %v933
      %v978 = vpop.f32.mrf.mxu0
      %v979 = vadd.f32 0.0, %v978
      %v980 = vpop.f32.mrf.mxu0
      %v981 = vadd.f32 0.0, %v980
      %v982 = vpop.f32.mrf.mxu0
      %v983 = vpop.f32.mrf.mxu0
      %984 = vdwg.mxu0
      %985 = vmatprep.subr.bf16.mxu0 0
      %986 = vmatpush1.bf16.msra.mxu0 0
      %987 = vmatprep.subr.bf16.mxu0 0
      %988 = vmatpush1.bf16.msra.mxu0 0
      %989 = vmatprep.subr.bf16.mxu0 0
      %990 = vmatpush1.bf16.msra.mxu0 0
      %991 = vmatprep.subr.bf16.mxu0 0
      %992 = vmatpush1.bf16.msra.mxu0 0
      %993 = vmatprep.subr.bf16.mxu0 0
      %994 = vmatpush1.bf16.msra.mxu0 0
      %995 = vmatprep.subr.bf16.mxu0 0
      %996 = vmatpush1.bf16.msra.mxu0 0
      %997 = vmatprep.subr.bf16.mxu0 0
      %998 = vmatpush1.bf16.msra.mxu0 0
      %999 = vmatprep.subr.bf16.mxu0 0
      %1000 = vmatpush1.bf16.msra.mxu0 %v942
      %1001 = vmatprep.subr.bf16.mxu0 0
      %1002 = vmatpush2.bf16.msra.mxu0 0
      %1003 = vmatprep.subr.bf16.mxu0 0
      %1004 = vmatpush2.bf16.msra.mxu0 0
      %1005 = vmatprep.subr.bf16.mxu0 0
      %1006 = vmatpush2.bf16.msra.mxu0 0
      %1007 = vmatprep.subr.bf16.mxu0 0
      %1008 = vmatpush2.bf16.msra.mxu0 0
      %1009 = vmatprep.subr.bf16.mxu0 0
      %1010 = vmatpush2.bf16.msra.mxu0 0
      %1011 = vmatprep.subr.bf16.mxu0 0
      %1012 = vmatpush2.bf16.msra.mxu0 0
      %1013 = vmatprep.subr.bf16.mxu0 0
      %1014 = vmatpush2.bf16.msra.mxu0 0
      %1015 = vmatprep.subr.bf16.mxu0 0
      %1016 = vmatpush2.bf16.msra.mxu0 0
      %1017 = vmatprep.mubr.bf16.mxu0 0
      %1018 = vmatmul.mubr.bf16.gmra.mxu0 %v933
      %v1019 = vpop.f32.mrf.mxu0
      %v1020 = vadd.f32 0.0, %v1019
      %v1021 = vpop.f32.mrf.mxu0
      %v1022 = vpop.f32.mrf.mxu0
      %v1023 = vpop.f32.mrf.mxu0
      %1024 = vdwg.mxu0
      %v1025 = vadd.f32 %v909, %v979
      %v1026 = vadd.f32 %v910, %v981
      %v1027 = vadd.f32 %v911, %v1020
      %s1028 = scalar_lea.vmem %s0, 56
      %v1029 = vld [vmem:[%s1028] sm:$0xf]
      %v1030 = vld [vmem:[%s1028 + $0x4] sm:$0xf]
      %v1033 = vunpack.c.l.b16 %v1029
      %v1034 = vunpack.c.l.b16 %v1030
      %v1035 = vpack.c.b16 %v1034, %v1033
      %1036 = vrot.lane.b32.xlu0 %v231, 91
      %v1037 = vpop.permute.xlu0 %1036
      %1038 = vrot.lane.b32.xlu0 %v232, 91
      %v1039 = vpop.permute.xlu0 %1038
      %1040 = vrot.lane.b32.xlu0 %v233, 91
      %v1041 = vpop.permute.xlu0 %1040
      %1042 = vrot.lane.b32.xlu0 %v234, 91
      %v1043 = vpop.permute.xlu0 %1042
      %vm1044 = vcmask 744448
      %v1045 = vsel %vm1044, %v1037, %v1039
      %v1046 = vsel %vm1044, %v1039, %v1041
      %v1047 = vsel %vm1044, %v1041, %v1043
      %v1049 = vsel %vm247, %v1035, 0
      %v1052 = vsel %vm251, %v1045, 0
      %v1055 = vsel %vm251, %v1046, 0
      %v1058 = vsel %vm251, %v1047, 0
      %1060 = vmatprep.subr.bf16.mxu0 0
      %1061 = vmatpush1.bf16.msra.mxu0 0
      %1062 = vmatprep.subr.bf16.mxu0 0
      %1063 = vmatpush1.bf16.msra.mxu0 0
      %1064 = vmatprep.subr.bf16.mxu0 0
      %1065 = vmatpush1.bf16.msra.mxu0 0
      %1066 = vmatprep.subr.bf16.mxu0 0
      %1067 = vmatpush1.bf16.msra.mxu0 0
      %1068 = vmatprep.subr.bf16.mxu0 0
      %1069 = vmatpush1.bf16.msra.mxu0 0
      %1070 = vmatprep.subr.bf16.mxu0 0
      %1071 = vmatpush1.bf16.msra.mxu0 0
      %1072 = vmatprep.subr.bf16.mxu0 0
      %1073 = vmatpush1.bf16.msra.mxu0 0
      %1074 = vmatprep.subr.bf16.mxu0 %v1055
      %1075 = vmatpush1.bf16.msra.mxu0 %v1052
      %1076 = vmatprep.subr.bf16.mxu0 0
      %1077 = vmatpush2.bf16.msra.mxu0 0
      %1078 = vmatprep.subr.bf16.mxu0 0
      %1079 = vmatpush2.bf16.msra.mxu0 0
      %1080 = vmatprep.subr.bf16.mxu0 0
      %1081 = vmatpush2.bf16.msra.mxu0 0
      %1082 = vmatprep.subr.bf16.mxu0 0
      %1083 = vmatpush2.bf16.msra.mxu0 0
      %1084 = vmatprep.subr.bf16.mxu0 0
      %1085 = vmatpush2.bf16.msra.mxu0 0
      %1086 = vmatprep.subr.bf16.mxu0 0
      %1087 = vmatpush2.bf16.msra.mxu0 0
      %1088 = vmatprep.subr.bf16.mxu0 0
      %1089 = vmatpush2.bf16.msra.mxu0 0
      %1090 = vmatprep.subr.bf16.mxu0 0
      %1091 = vmatpush2.bf16.msra.mxu0 0
      %1092 = vmatprep.mubr.bf16.mxu0 0
      %1093 = vmatmul.mubr.bf16.gmra.mxu0 %v1049
      %v1094 = vpop.f32.mrf.mxu0
      %v1095 = vadd.f32 0.0, %v1094
      %v1096 = vpop.f32.mrf.mxu0
      %v1097 = vadd.f32 0.0, %v1096
      %v1098 = vpop.f32.mrf.mxu0
      %v1099 = vpop.f32.mrf.mxu0
      %1100 = vdwg.mxu0
      %1101 = vmatprep.subr.bf16.mxu0 0
      %1102 = vmatpush1.bf16.msra.mxu0 0
      %1103 = vmatprep.subr.bf16.mxu0 0
      %1104 = vmatpush1.bf16.msra.mxu0 0
      %1105 = vmatprep.subr.bf16.mxu0 0
      %1106 = vmatpush1.bf16.msra.mxu0 0
      %1107 = vmatprep.subr.bf16.mxu0 0
      %1108 = vmatpush1.bf16.msra.mxu0 0
      %1109 = vmatprep.subr.bf16.mxu0 0
      %1110 = vmatpush1.bf16.msra.mxu0 0
      %1111 = vmatprep.subr.bf16.mxu0 0
      %1112 = vmatpush1.bf16.msra.mxu0 0
      %1113 = vmatprep.subr.bf16.mxu0 0
      %1114 = vmatpush1.bf16.msra.mxu0 0
      %1115 = vmatprep.subr.bf16.mxu0 0
      %1116 = vmatpush1.bf16.msra.mxu0 %v1058
      %1117 = vmatprep.subr.bf16.mxu0 0
      %1118 = vmatpush2.bf16.msra.mxu0 0
      %1119 = vmatprep.subr.bf16.mxu0 0
      %1120 = vmatpush2.bf16.msra.mxu0 0
      %1121 = vmatprep.subr.bf16.mxu0 0
      %1122 = vmatpush2.bf16.msra.mxu0 0
      %1123 = vmatprep.subr.bf16.mxu0 0
      %1124 = vmatpush2.bf16.msra.mxu0 0
      %1125 = vmatprep.subr.bf16.mxu0 0
      %1126 = vmatpush2.bf16.msra.mxu0 0
      %1127 = vmatprep.subr.bf16.mxu0 0
      %1128 = vmatpush2.bf16.msra.mxu0 0
      %1129 = vmatprep.subr.bf16.mxu0 0
      %1130 = vmatpush2.bf16.msra.mxu0 0
      %1131 = vmatprep.subr.bf16.mxu0 0
      %1132 = vmatpush2.bf16.msra.mxu0 0
      %1133 = vmatprep.mubr.bf16.mxu0 0
      %1134 = vmatmul.mubr.bf16.gmra.mxu0 %v1049
      %v1135 = vpop.f32.mrf.mxu0
      %v1136 = vadd.f32 0.0, %v1135
      %v1137 = vpop.f32.mrf.mxu0
      %v1138 = vpop.f32.mrf.mxu0
      %v1139 = vpop.f32.mrf.mxu0
      %1140 = vdwg.mxu0
      %v1141 = vadd.f32 %v1025, %v1095
      %v1142 = vadd.f32 %v1026, %v1097
      %v1143 = vadd.f32 %v1027, %v1136
      %s1144 = scalar_lea.vmem %s0, 64
      %v1145 = vld [vmem:[%s1144] sm:$0xf]
      %v1146 = vld [vmem:[%s1144 + $0x4] sm:$0xf]
      %v1149 = vunpack.c.l.b16 %v1145
      %v1150 = vunpack.c.l.b16 %v1146
      %v1151 = vpack.c.b16 %v1150, %v1149
      %1152 = vrot.lane.b32.xlu0 %v231, 90
      %v1153 = vpop.permute.xlu0 %1152
      %1154 = vrot.lane.b32.xlu0 %v232, 90
      %v1155 = vpop.permute.xlu0 %1154
      %1156 = vrot.lane.b32.xlu0 %v233, 90
      %v1157 = vpop.permute.xlu0 %1156
      %1158 = vrot.lane.b32.xlu0 %v234, 90
      %v1159 = vpop.permute.xlu0 %1158
      %vm1160 = vcmask 736256
      %v1161 = vsel %vm1160, %v1153, %v1155
      %v1162 = vsel %vm1160, %v1155, %v1157
      %v1163 = vsel %vm1160, %v1157, %v1159
      %v1165 = vsel %vm247, %v1151, 0
      %v1168 = vsel %vm251, %v1161, 0
      %v1171 = vsel %vm251, %v1162, 0
      %v1174 = vsel %vm251, %v1163, 0
      %1176 = vmatprep.subr.bf16.mxu0 0
      %1177 = vmatpush1.bf16.msra.mxu0 0
      %1178 = vmatprep.subr.bf16.mxu0 0
      %1179 = vmatpush1.bf16.msra.mxu0 0
      %1180 = vmatprep.subr.bf16.mxu0 0
      %1181 = vmatpush1.bf16.msra.mxu0 0
      %1182 = vmatprep.subr.bf16.mxu0 0
      %1183 = vmatpush1.bf16.msra.mxu0 0
      %1184 = vmatprep.subr.bf16.mxu0 0
      %1185 = vmatpush1.bf16.msra.mxu0 0
      %1186 = vmatprep.subr.bf16.mxu0 0
      %1187 = vmatpush1.bf16.msra.mxu0 0
      %1188 = vmatprep.subr.bf16.mxu0 0
      %1189 = vmatpush1.bf16.msra.mxu0 0
      %1190 = vmatprep.subr.bf16.mxu0 %v1171
      %1191 = vmatpush1.bf16.msra.mxu0 %v1168
      %1192 = vmatprep.subr.bf16.mxu0 0
      %1193 = vmatpush2.bf16.msra.mxu0 0
      %1194 = vmatprep.subr.bf16.mxu0 0
      %1195 = vmatpush2.bf16.msra.mxu0 0
      %1196 = vmatprep.subr.bf16.mxu0 0
      %1197 = vmatpush2.bf16.msra.mxu0 0
      %1198 = vmatprep.subr.bf16.mxu0 0
      %1199 = vmatpush2.bf16.msra.mxu0 0
      %1200 = vmatprep.subr.bf16.mxu0 0
      %1201 = vmatpush2.bf16.msra.mxu0 0
      %1202 = vmatprep.subr.bf16.mxu0 0
      %1203 = vmatpush2.bf16.msra.mxu0 0
      %1204 = vmatprep.subr.bf16.mxu0 0
      %1205 = vmatpush2.bf16.msra.mxu0 0
      %1206 = vmatprep.subr.bf16.mxu0 0
      %1207 = vmatpush2.bf16.msra.mxu0 0
      %1208 = vmatprep.mubr.bf16.mxu0 0
      %1209 = vmatmul.mubr.bf16.gmra.mxu0 %v1165
      %v1210 = vpop.f32.mrf.mxu0
      %v1211 = vadd.f32 0.0, %v1210
      %v1212 = vpop.f32.mrf.mxu0
      %v1213 = vadd.f32 0.0, %v1212
      %v1214 = vpop.f32.mrf.mxu0
      %v1215 = vpop.f32.mrf.mxu0
      %1216 = vdwg.mxu0
      %1217 = vmatprep.subr.bf16.mxu0 0
      %1218 = vmatpush1.bf16.msra.mxu0 0
      %1219 = vmatprep.subr.bf16.mxu0 0
      %1220 = vmatpush1.bf16.msra.mxu0 0
      %1221 = vmatprep.subr.bf16.mxu0 0
      %1222 = vmatpush1.bf16.msra.mxu0 0
      %1223 = vmatprep.subr.bf16.mxu0 0
      %1224 = vmatpush1.bf16.msra.mxu0 0
      %1225 = vmatprep.subr.bf16.mxu0 0
      %1226 = vmatpush1.bf16.msra.mxu0 0
      %1227 = vmatprep.subr.bf16.mxu0 0
      %1228 = vmatpush1.bf16.msra.mxu0 0
      %1229 = vmatprep.subr.bf16.mxu0 0
      %1230 = vmatpush1.bf16.msra.mxu0 0
      %1231 = vmatprep.subr.bf16.mxu0 0
      %1232 = vmatpush1.bf16.msra.mxu0 %v1174
      %1233 = vmatprep.subr.bf16.mxu0 0
      %1234 = vmatpush2.bf16.msra.mxu0 0
      %1235 = vmatprep.subr.bf16.mxu0 0
      %1236 = vmatpush2.bf16.msra.mxu0 0
      %1237 = vmatprep.subr.bf16.mxu0 0
      %1238 = vmatpush2.bf16.msra.mxu0 0
      %1239 = vmatprep.subr.bf16.mxu0 0
      %1240 = vmatpush2.bf16.msra.mxu0 0
      %1241 = vmatprep.subr.bf16.mxu0 0
      %1242 = vmatpush2.bf16.msra.mxu0 0
      %1243 = vmatprep.subr.bf16.mxu0 0
      %1244 = vmatpush2.bf16.msra.mxu0 0
      %1245 = vmatprep.subr.bf16.mxu0 0
      %1246 = vmatpush2.bf16.msra.mxu0 0
      %1247 = vmatprep.subr.bf16.mxu0 0
      %1248 = vmatpush2.bf16.msra.mxu0 0
      %1249 = vmatprep.mubr.bf16.mxu0 0
      %1250 = vmatmul.mubr.bf16.gmra.mxu0 %v1165
      %v1251 = vpop.f32.mrf.mxu0
      %v1252 = vadd.f32 0.0, %v1251
      %v1253 = vpop.f32.mrf.mxu0
      %v1254 = vpop.f32.mrf.mxu0
      %v1255 = vpop.f32.mrf.mxu0
      %1256 = vdwg.mxu0
      %v1257 = vadd.f32 %v1141, %v1211
      %v1258 = vadd.f32 %v1142, %v1213
      %v1259 = vadd.f32 %v1143, %v1252
      %s1260 = smul.u32 %s16, 3
      %s1261 = smul.addr %s1260, 8
      %s1262 = scalar_lea.vmem %s5, %s1261
      %1263 = vst [vmem:[%s1262] sm:$0xff] %v1257
      %1264 = vst [vmem:[%s1262 + $0x8] sm:$0xff] %v1258
      %1265 = vst [vmem:[%s1262 + $0x10] sm:$0xff] %v1259
      %p1266 = scmp.eq.s32.totalorder %s16, 1
      // Predicated region
      $region41: #{conv2d_batchnorm.1} parent=39 // pred_check
        %p1267 = pneg %p1266
      $region42: #{conv2d_batchnorm.1} parent=39 // pred_check_branch
        %1269 = sbr.rel (%p1267) target = $region44
      $region43: #{conv2d_batchnorm.1} parent=39 // pred_region
        %v1270 = vld [vmem:[%s5] sm:$0xff]
        %v1271 = vld [vmem:[%s5 + $0x8] sm:$0xff]
        %v1272 = vld [vmem:[%s5 + $0x10] sm:$0xff]
        %v1273 = vld [vmem:[%s5 + $0x18] sm:$0xff]
        %v1274 = vld [vmem:[%s5 + $0x20] sm:$0xff]
        %v1275 = vld [vmem:[%s5 + $0x28] sm:$0xff]
        %v1276 = vld [vmem:[%s2] sm:$0x7]
        %v1278 = vlaneseq
        %v1279 = vshrl.u32 %v1278, 7
        %v1280 = vsub.s32 0, %v1279
        %v1281 = vrot.slane %v1276, %v1280
        %v1282 = vlaneseq
        %v1283 = vshrl.u32 %v1282, 7
        %v1284 = vsub.s32 1, %v1283
        %v1285 = vrot.slane %v1276, %v1284
        %v1286 = vlaneseq
        %v1287 = vshrl.u32 %v1286, 7
        %v1288 = vsub.s32 2, %v1287
        %v1289 = vrot.slane %v1276, %v1288
        %v1293 = vmul.f32 %v1270, %v1281
        %v1294 = vmul.f32 %v1271, %v1285
        %v1295 = vmul.f32 %v1272, %v1289
        %v1296 = vmul.f32 %v1273, %v1281
        %v1297 = vmul.f32 %v1274, %v1285
        %v1298 = vmul.f32 %v1275, %v1289
        %v1299 = vadd.f32 %v1293, %v1294
        %v1300 = vadd.f32 %v1299, %v1295
        %1301 = vadd.xlane.f32.xlu0 %v1300
        %v1302 = vpop.xlane.xlu0 %1301
        %v1303 = vadd.f32 %v1296, %v1297
        %v1304 = vadd.f32 %v1303, %v1298
        %1305 = vadd.xlane.f32.xlu0 %v1304
        %v1306 = vpop.xlane.xlu0 %1305
        %v1307 = vadd.f32 %v1302, %v1306
        %v1308 = vmul.f32 %v1307, 0.001953125
        %v1309 = vsub.f32 %v1270, %v1308
        %v1310 = vsub.f32 %v1271, %v1308
        %v1311 = vsub.f32 %v1272, %v1308
        %v1312 = vsub.f32 %v1273, %v1308
        %v1313 = vsub.f32 %v1274, %v1308
        %v1314 = vsub.f32 %v1275, %v1308
        %v1315 = vmul.f32 %v1309, %v1281
        %v1316 = vmul.f32 %v1310, %v1285
        %v1317 = vmul.f32 %v1311, %v1289
        %v1318 = vmul.f32 %v1312, %v1281
        %v1319 = vmul.f32 %v1313, %v1285
        %v1320 = vmul.f32 %v1314, %v1289
        %v1321 = vmul.f32 %v1315, %v1315
        %v1322 = vmul.f32 %v1316, %v1316
        %v1323 = vmul.f32 %v1317, %v1317
        %v1324 = vmul.f32 %v1318, %v1318
        %v1325 = vmul.f32 %v1319, %v1319
        %v1326 = vmul.f32 %v1320, %v1320
        %v1327 = vadd.f32 %v1321, %v1322
        %v1328 = vadd.f32 %v1327, %v1323
        %1329 = vadd.xlane.f32.xlu0 %v1328
        %v1330 = vpop.xlane.xlu0 %1329
        %v1331 = vadd.f32 %v1324, %v1325
        %v1332 = vadd.f32 %v1331, %v1326
        %1333 = vadd.xlane.f32.xlu0 %v1332
        %v1334 = vpop.xlane.xlu0 %1333
        %v1335 = vadd.f32 %v1330, %v1334
        %v1336 = vmul.f32 %v1335, 0.001953125
        %v1337 = vld [vmem:[%s3] sm:$0xff]
        %v1338 = vadd.f32 %v1336, 1e-05
        %v1339 = vrsqrt.pop %v1338
        %v1340 = vmul.f32 %v1337, %v1339
        %v1341 = vld [vmem:[%s4] sm:$0xff]
        %v1342 = vmul.f32 %v1308, %v1340
        %v1343 = vsub.f32 %v1341, %v1342
        %1345 = vset.pattern.permute.xlu0 0
        %1346 = vperm.xlu0 %1345, %v1340
        %v1347 = vpop.permute.xlu0 %1346
        %v1349 = vmul.f32 %v1270, %v1347
        %v1350 = vmul.f32 %v1271, %v1347
        %v1351 = vmul.f32 %v1272, %v1347
        %v1352 = vmul.f32 %v1273, %v1347
        %v1353 = vmul.f32 %v1274, %v1347
        %v1354 = vmul.f32 %v1275, %v1347
        %1356 = vset.pattern.permute.xlu0 0
        %1357 = vperm.xlu0 %1356, %v1343
        %v1358 = vpop.permute.xlu0 %1357
        %v1360 = vadd.f32 %v1349, %v1358
        %v1361 = vadd.f32 %v1350, %v1358
        %v1362 = vadd.f32 %v1351, %v1358
        %v1363 = vadd.f32 %v1352, %v1358
        %v1364 = vadd.f32 %v1353, %v1358
        %v1365 = vadd.f32 %v1354, %v1358
        %v1366 = vmul.f32 %v1360, 0.1
        %v1367 = vmul.f32 %v1361, 0.1
        %v1368 = vmul.f32 %v1362, 0.1
        %v1369 = vmul.f32 %v1363, 0.1
        %v1370 = vmul.f32 %v1364, 0.1
        %v1371 = vmul.f32 %v1365, 0.1
        %v1372 = vmax.f32 %v1360, %v1366
        %v1373 = vmax.f32 %v1361, %v1367
        %v1374 = vmax.f32 %v1362, %v1368
        %v1375 = vmax.f32 %v1363, %v1369
        %v1376 = vmax.f32 %v1364, %v1370
        %v1377 = vmax.f32 %v1365, %v1371
        %1378 = vst [vmem:[%s5] sm:$0xff] %v1372
        %1379 = vst [vmem:[%s5 + $0x8] sm:$0xff] %v1373
        %1380 = vst [vmem:[%s5 + $0x10] sm:$0xff] %v1374
        %1381 = vst [vmem:[%s5 + $0x18] sm:$0xff] %v1375
        %1382 = vst [vmem:[%s5 + $0x20] sm:$0xff] %v1376
        %1383 = vst [vmem:[%s5 + $0x28] sm:$0xff] %v1377
      $region44: #{conv2d_batchnorm.1} parent=39 // pred_fallthru
        _
      // Predicated region
      $region45: #{conv2d_batchnorm.1} parent=39 // pred_check
        %p1384 = pneg %p139
      $region46: #{conv2d_batchnorm.1} parent=39 // pred_check_branch
        %1386 = sbr.rel (%p1384) target = $region48
      $region47: #{conv2d_batchnorm.1} parent=39 // pred_region
        _
      $region48: #{conv2d_batchnorm.1} parent=39 // pred_fallthru
        _
      // Predicated region
      $region49: #{conv2d_batchnorm.1} parent=39 // pred_check
        %p1387 = pneg %p139
      $region50: #{conv2d_batchnorm.1} parent=39 // pred_check_branch
        %1389 = sbr.rel (%p1387) target = $region52
      $region51: #{conv2d_batchnorm.1} parent=39 // pred_region
        _
      $region52: #{conv2d_batchnorm.1} parent=39 // pred_fallthru
        _
    $region40: #{conv2d_batchnorm.1} parent=5 // pred_fallthru
      _
    %p1390 = scmp.le.s32.totalorder 2, %s11
    // Predicated region
    $region53: #{conv2d_batchnorm.1} parent=5 // pred_check
      %p1391 = pneg %p1390
    $region54: #{conv2d_batchnorm.1} parent=5 // pred_check_branch
      %1393 = sbr.rel (%p1391) target = $region56
    $region55: #{conv2d_batchnorm.1} parent=5 // pred_region
      %s1394 = ssub.s32 %s11, 2
    $region56: #{conv2d_batchnorm.1} parent=5 // pred_fallthru
      _
  $region6: #{conv2d_batchnorm.1} parent=0 // loop_footer
    %s15 = sadd.s32 1, %s11
  $region7: #{conv2d_batchnorm.1} parent=0 // loop_footer_branch
    %10 = sbr.rel target = $region3
  $region8: #{conv2d_batchnorm.1} parent=0 // loop_exit
    _

</llo_original>
